<compile_context>
chip_gen: v6e
topology: v6e:2x2x1
jax: 0.10.0
libtpu: 0.0.40
codegen_flags: <defaults>
</compile_context>

<pallas_src>
import functools

import jax
import jax.numpy as jnp
import numpy as np
from jax import lax
from jax.experimental import pallas as pl
from jax.experimental.pallas import tpu as pltpu


# ----------------------------- configuration --------------------------------
N_NODES = 16         # self.n (number of meta-part / class nodes); power of 2
IN_DIM = 64          # cfg.in_dim
SEM_DIM = 64         # cfg.semantic_dim
HID_DIM = (IN_DIM + SEM_DIM) // 2   # encoder output dim = 64
AGG_HID = 300        # aggregator hidden (nn.Linear(..., 300))
AGG_PAD = 384        # aggregator hidden zero-padded to 3*128 lanes
DEC_HID = 512        # decoder hidden (nn.Linear(..., 512))
OUT_DIM = 64         # cfg.out_dim
NB = 2               # batch size

assert N_NODES & (N_NODES - 1) == 0, "node-index mask assumes power-of-two N"


# ------------------------------- the kernel ---------------------------------
def protocom_kernel(
    # scalar prefetch (SMEM)
    cid_sref,          # (NB,) int32
    # inputs (VMEM, all fully resident)
    x_ref,             # (1, spb, IN_DIM)        f32
    cid_col_ref,       # (1, spb*N, 1)           int32  class id per node row
    e_ref,             # (spb*N, spb)            f32    E[b*N+j, b] = 1
    et_ref,            # (spb, spb*N)            f32    E^T
    sem_h_ref,         # (N, N, AGG_PAD)         f32    sem_full @ Wa1[:S] (precomputed)
    adj_t_ref,         # (N, N)                  f32    adj^T
    z_pre_ref,         # (N, HID_DIM)            f32    meta @ We          (precomputed)
    wa1_x_ref,         # (IN_DIM, AGG_PAD)       f32    Wa1[S:]
    ba1_ref,           # (1, AGG_PAD)            f32
    wa2_ref,           # (1, AGG_PAD)            f32
    ba2_ref,           # (1, 1)                  f32
    we_ref,            # (IN_DIM, HID_DIM)       f32
    be_ref,            # (1, HID_DIM)            f32
    wd1_ref,           # (HID_DIM, DEC_HID)      f32
    bd1_ref,           # (1, DEC_HID)            f32
    wd2_ref,           # (DEC_HID, OUT_DIM)      f32
    bd2_ref,           # (1, OUT_DIM)            f32
    # output
    out_ref,           # (1, 1, spb*OUT_DIM)     f32    lane-dense output row
    *,
    spb,               # samples per block (static)
):
    blk = pl.program_id(0)
    rows = spb * N_NODES

    x_blk = x_ref[0]                                    # (spb, IN_DIM)
    cid_col = cid_col_ref[0]                            # (rows, 1) int32
    e_mat = e_ref[...]                                  # (rows, spb)
    et_mat = et_ref[...]                                # (spb, rows)

    # ---- batched masks (one op each; no per-sample loop) ---------------------
    row_iota = lax.broadcasted_iota(jnp.int32, (rows, 1), 0)
    node_idx = jnp.bitwise_and(row_iota, N_NODES - 1)   # row % N (N power of 2)
    eye_b = cid_col == node_idx                         # (rows, 1) bool
    eye_f = eye_b.astype(jnp.float32)

    class_iota = lax.broadcasted_iota(jnp.int32, (rows, N_NODES), 1)
    adj_mask = (cid_col == class_iota).astype(jnp.float32)           # (rows, N)
    adj_t_tiled = jnp.concatenate([adj_t_ref[...]] * spb, axis=0)    # (rows, N)
    # adj_row[b*N+j] = adj[cid_b, j] = adj_t[j, cid_b]
    adjc = jnp.sum(adj_t_tiled * adj_mask, axis=-1, keepdims=True)   # (rows, 1)

    # ---- aggregator: Linear(S+in -> 300) + ReLU + Linear(300 -> 1) -----------
    # semantic half was constant-folded at model load; gather sem_h[cid_b]
    # (the only remaining per-sample op: one dynamic-index VMEM read each).
    sem_h = jnp.concatenate(
        [sem_h_ref[cid_sref[blk * spb + b]] for b in range(spb)], axis=0)   # (rows, AGG_PAD)
    # x half: one (spb,64)x(64,384) matmul, expanded to node rows on the MXU.
    xw = jnp.dot(x_blk, wa1_x_ref[...],
                 preferred_element_type=jnp.float32)                 # (spb, AGG_PAD)
    xw_rows = jnp.dot(e_mat, xw,
                      preferred_element_type=jnp.float32)            # (rows, AGG_PAD)
    h = jnp.maximum(sem_h + xw_rows + ba1_ref[...], 0.0)             # (rows, AGG_PAD)
    fuse = (jnp.sum(h * wa2_ref[...], axis=-1, keepdims=True)
            + ba2_ref[...])                                          # (rows, 1)

    # ---- adjacency: adj[cid] * fuse * (1 - eye) + eye -------------------------
    adj_final = adjc * fuse * (1.0 - eye_f) + eye_f                  # (rows, 1)

    # ---- encoder: meta@We precomputed; only the spb replaced rows hit the MXU
    zx = jnp.dot(x_blk, we_ref[...],
                 preferred_element_type=jnp.float32)                 # (spb, H)
    zx_rows = jnp.dot(e_mat, zx,
                      preferred_element_type=jnp.float32)            # (rows, H)
    z_pre_tiled = jnp.concatenate([z_pre_ref[...]] * spb, axis=0)    # (rows, H)
    z = jnp.maximum(jnp.where(eye_b, zx_rows, z_pre_tiled) + be_ref[...], 0.0)

    # ---- graph aggregation: per-sample reduce as one small matmul (E^T) ------
    g = jnp.dot(et_mat, adj_final * z,
                preferred_element_type=jnp.float32)                  # (spb, H)

    # ---- decoder: Linear(H -> 512) + ReLU + Linear(512 -> out_dim) -----------
    d1 = jnp.maximum(
        jnp.dot(g, wd1_ref[...], preferred_element_type=jnp.float32)
        + bd1_ref[...], 0.0)                                         # (spb, DEC_HID)
    out = (jnp.dot(d1, wd2_ref[...], preferred_element_type=jnp.float32)
           + bd2_ref[...])                                           # (spb, OUT_DIM)

    # ---- lane-dense store: pack the spb sample rows along lanes ---------------
    out_ref[0] = jnp.concatenate(
        [out[b:b + 1, :] for b in range(spb)], axis=-1).astype(out_ref.dtype)


# ------------------------ one-time model-load prep ----------------------------
def prepare_protocom_state(meta, sem_full, adj, params):
    """One-time, model-load preparation (NOT per forward call):
       * pad aggregator hidden dim 300 -> 384 (exact: extra columns are zero),
       * constant-fold the cid-/x-independent matmuls out of the kernel:
           sem_h[c, j, :] = sem_full[c, j, :] @ Wa1[:S]   (N, N, 384) f32
           z_pre[j, :]    = meta[j, :]        @ We        (N, H)      f32
    """
    (wa1, ba1, wa2, ba2, we, be, wd1, bd1, wd2, bd2) = params
    pad = AGG_PAD - wa1.shape[1]
    wa1p = jnp.pad(wa1, ((0, 0), (0, pad)))
    ba1p = jnp.pad(ba1, ((0, 0), (0, pad)))
    wa2p = jnp.pad(wa2, ((0, 0), (0, pad)))
    hi = lax.Precision.HIGHEST
    sem_h = jnp.einsum("cjs,sp->cjp", sem_full, wa1p[:SEM_DIM, :], precision=hi)
    z_pre = jnp.dot(meta, we, precision=hi)
    return {
        "sem_h": sem_h.astype(jnp.float32),          # (N, N, AGG_PAD)
        "z_pre": z_pre.astype(jnp.float32),          # (N, HID_DIM)
        "adj_t": jnp.asarray(adj).T.astype(jnp.float32),
        "wa1_x": wa1p[SEM_DIM:, :].astype(jnp.float32),
        "ba1": ba1p.astype(jnp.float32),
        "wa2": wa2p.astype(jnp.float32),
        "ba2": jnp.asarray(ba2, jnp.float32),
        "we": jnp.asarray(we, jnp.float32),
        "be": jnp.asarray(be, jnp.float32),
        "wd1": jnp.asarray(wd1, jnp.float32),
        "bd1": jnp.asarray(bd1, jnp.float32),
        "wd2": jnp.asarray(wd2, jnp.float32),
        "bd2": jnp.asarray(bd2, jnp.float32),
    }


# ------------------------------- the wrapper ---------------------------------
@functools.partial(jax.jit, static_argnames=("samples_per_block",))
def protocom_forward(x, cid, state, *, samples_per_block=None):
    """x: (NB, IN_DIM) f32, cid: (NB,) int32 -> (NB, OUT_DIM) f32."""
    nb = x.shape[0]
    spb = nb if samples_per_block is None else samples_per_block
    assert nb % spb == 0
    nblocks = nb // spb
    rows = spb * N_NODES

    cid = cid.astype(jnp.int32)
    x3 = x.reshape(nblocks, spb, IN_DIM)
    # per-node-row copy of the class id (tiny VMEM input -> batched in-kernel masks)
    cid_col = jnp.repeat(cid, N_NODES).reshape(nblocks, rows, 1)

    # constant expand / reduce matrices: E[b*N+j, b] = 1 (built on host, static)
    e_np = np.repeat(np.eye(spb, dtype=np.float32), N_NODES, axis=0)
    e_mat = jnp.asarray(e_np)            # (rows, spb)
    et_mat = jnp.asarray(e_np.T)         # (spb, rows)

    def full_spec(shape):
        nd = len(shape)
        return pl.BlockSpec(shape, lambda g, c, nd=nd: (0,) * nd)

    grid_spec = pltpu.PrefetchScalarGridSpec(
        num_scalar_prefetch=1,
        grid=(nblocks,),
        in_specs=[
            pl.BlockSpec((1, spb, IN_DIM), lambda g, c: (g, 0, 0)),   # x block
            pl.BlockSpec((1, rows, 1), lambda g, c: (g, 0, 0)),       # cid per node row
            full_spec(e_mat.shape), full_spec(et_mat.shape),
            full_spec(state["sem_h"].shape),
            full_spec(state["adj_t"].shape),
            full_spec(state["z_pre"].shape),
            full_spec(state["wa1_x"].shape),
            full_spec(state["ba1"].shape),
            full_spec(state["wa2"].shape),
            full_spec(state["ba2"].shape),
            full_spec(state["we"].shape),
            full_spec(state["be"].shape),
            full_spec(state["wd1"].shape),
            full_spec(state["bd1"].shape),
            full_spec(state["wd2"].shape),
            full_spec(state["bd2"].shape),
        ],
        out_specs=pl.BlockSpec((1, 1, spb * OUT_DIM), lambda g, c: (g, 0, 0)),
    )

    out3 = pl.pallas_call(
        functools.partial(protocom_kernel, spb=spb),
        out_shape=jax.ShapeDtypeStruct((nblocks, 1, spb * OUT_DIM), jnp.float32),
        grid_spec=grid_spec,
        # Blocks are independent: "parallel" is a no-op at the default
        # grid=(1,); for large batches use samples_per_block = nb//2 so the
        # two blocks shard across v7x's TensorCores.
        compiler_params=pltpu.CompilerParams(
            dimension_semantics=("parallel",)),
    )(cid, x3, cid_col, e_mat, et_mat,
      state["sem_h"], state["adj_t"], state["z_pre"],
      state["wa1_x"], state["ba1"], state["wa2"], state["ba2"],
      state["we"], state["be"], state["wd1"], state["bd1"],
      state["wd2"], state["bd2"])

    return out3.reshape(nb, OUT_DIM)


# --------------------------- numpy f64 reference ------------------------------
def protocom_reference(x, cid, meta, sem_full, adj, params):
    (wa1, ba1, wa2, ba2, we, be, wd1, bd1, wd2, bd2) = [
        np.asarray(p, np.float64) for p in params]
    x = np.asarray(x, np.float64)
    meta = np.asarray(meta, np.float64)
    sem_full = np.asarray(sem_full, np.float64)
    adj = np.asarray(adj, np.float64)
    cid = np.asarray(cid)

    outs = []
    for i in range(x.shape[0]):
        c = int(cid[i])
        inp = meta.copy()
        inp[c, :] = x[i]                                                # (N, IN_DIM)
        sem_cat = np.concatenate(
            [sem_full[c], np.broadcast_to(x[i], (N_NODES, IN_DIM))], axis=-1)
        h = np.maximum(sem_cat @ wa1 + ba1, 0.0)                        # (N, 300)
        fuse = h @ wa2[0] + ba2[0, 0]                                   # (N,)
        eye = np.zeros((N_NODES,), np.float64)
        eye[c] = 1.0
        adj_f = adj[c] * fuse * (1.0 - eye) + eye                       # (N,)
        z = np.maximum(inp @ we + be, 0.0)                              # (N, H)
        g = adj_f @ z                                                   # (H,)
        d1 = np.maximum(g @ wd1 + bd1[0], 0.0)                          # (512,)
        outs.append(d1 @ wd2 + bd2[0])                                  # (OUT_DIM,)
    return np.stack(outs)


# ----------------------------------- main ------------------------------------
if __name__ == "__main__":
    key = jax.random.PRNGKey(0)
    ks = jax.random.split(key, 16)

    def rand(k, shape, scale=0.05):
        return jax.random.normal(k, shape, dtype=jnp.float32) * scale

    # deterministic parameter init (shapes follow the module's __init__)
    wa1 = rand(ks[0], (SEM_DIM + IN_DIM, AGG_HID))
    ba1 = rand(ks[1], (1, AGG_HID))
    wa2 = rand(ks[2], (1, AGG_HID))          # Linear(300, 1).weight, kept as a row
    ba2 = rand(ks[3], (1, 1))
    we = rand(ks[4], (IN_DIM, HID_DIM))
    be = rand(ks[5], (1, HID_DIM))
    wd1 = rand(ks[6], (HID_DIM, DEC_HID))
    bd1 = rand(ks[7], (1, DEC_HID))
    wd2 = rand(ks[8], (DEC_HID, OUT_DIM))
    bd2 = rand(ks[9], (1, OUT_DIM))
    params = (wa1, ba1, wa2, ba2, we, be, wd1, bd1, wd2, bd2)

    # deterministic module "state" (metapart means, semantic embeddings, prior adj)
    meta = rand(ks[10], (N_NODES, IN_DIM), scale=1.0)            # metapart_feature means
    sem_full = rand(ks[11], (N_NODES, N_NODES, SEM_DIM), 1.0)    # semantic_feature
    adj = jax.random.uniform(ks[12], (N_NODES, N_NODES), jnp.float32)  # prior adjacency

    # inputs
    x = rand(ks[13], (NB, IN_DIM), scale=1.0)
    cid = jax.random.randint(ks[14], (NB,), 0, N_NODES, dtype=jnp.int32)

    # one-time (model-load) preparation: hoists sem@Wa1 and meta@We out of the kernel
    state = prepare_protocom_state(meta, sem_full, adj, params)
    state = jax.block_until_ready(state)

    out = protocom_forward(x, cid, state)
    out = jax.block_until_ready(out)

    ref = protocom_reference(x, cid, meta, sem_full, adj, params)
    np.testing.assert_allclose(np.asarray(out, np.float64), ref, rtol=2e-2, atol=2e-2)

    print("KERNEL_OK")
</pallas_src>

<mosaic_0001>
module attributes {stable_mosaic.version = 11 : i64} {
  func.func @protocom_kernel(%arg0: i32, %arg1: memref<2xi32, #tpu.memory_space<smem>>, %arg2: memref<1x2x64xf32, #tpu.memory_space<vmem>>, %arg3: memref<1x32x1xi32, #tpu.memory_space<vmem>>, %arg4: memref<32x2xf32, #tpu.memory_space<vmem>>, %arg5: memref<2x32xf32, #tpu.memory_space<vmem>>, %arg6: memref<16x16x384xf32, #tpu.memory_space<vmem>>, %arg7: memref<16x16xf32, #tpu.memory_space<vmem>>, %arg8: memref<16x64xf32, #tpu.memory_space<vmem>>, %arg9: memref<64x384xf32, #tpu.memory_space<vmem>>, %arg10: memref<1x384xf32, #tpu.memory_space<vmem>>, %arg11: memref<1x384xf32, #tpu.memory_space<vmem>>, %arg12: memref<1x1xf32, #tpu.memory_space<vmem>>, %arg13: memref<64x64xf32, #tpu.memory_space<vmem>>, %arg14: memref<1x64xf32, #tpu.memory_space<vmem>>, %arg15: memref<64x512xf32, #tpu.memory_space<vmem>>, %arg16: memref<1x512xf32, #tpu.memory_space<vmem>>, %arg17: memref<512x64xf32, #tpu.memory_space<vmem>>, %arg18: memref<1x64xf32, #tpu.memory_space<vmem>>, %arg19: memref<1x1x128xf32, #tpu.memory_space<vmem>>) attributes {dimension_semantics = [#tpu.dimension_semantics<parallel>], iteration_bounds = array<i64: 1>, scalar_prefetch = 1 : i64, scratch_operands = 0 : i64, tpu.core_type = #tpu.core_type<tc>, window_params = [{transform_indices = @transform_0, window_bounds = array<i64: 1, 2, 64>}, {transform_indices = @transform_1, window_bounds = array<i64: 1, 32, 1>}, {pipeline_mode = #tpu.pipeline_mode<synchronous>, transform_indices = @transform_2, window_bounds = array<i64: 32, 2>}, {pipeline_mode = #tpu.pipeline_mode<synchronous>, transform_indices = @transform_3, window_bounds = array<i64: 2, 32>}, {pipeline_mode = #tpu.pipeline_mode<synchronous>, transform_indices = @transform_4, window_bounds = array<i64: 16, 16, 384>}, {pipeline_mode = #tpu.pipeline_mode<synchronous>, transform_indices = @transform_5, window_bounds = array<i64: 16, 16>}, {pipeline_mode = #tpu.pipeline_mode<synchronous>, transform_indices = @transform_6, window_bounds = array<i64: 16, 64>}, {pipeline_mode = #tpu.pipeline_mode<synchronous>, transform_indices = @transform_7, window_bounds = array<i64: 64, 384>}, {pipeline_mode = #tpu.pipeline_mode<synchronous>, transform_indices = @transform_8, window_bounds = array<i64: 1, 384>}, {pipeline_mode = #tpu.pipeline_mode<synchronous>, transform_indices = @transform_9, window_bounds = array<i64: 1, 384>}, {pipeline_mode = #tpu.pipeline_mode<synchronous>, transform_indices = @transform_10, window_bounds = array<i64: 1, 1>}, {pipeline_mode = #tpu.pipeline_mode<synchronous>, transform_indices = @transform_11, window_bounds = array<i64: 64, 64>}, {pipeline_mode = #tpu.pipeline_mode<synchronous>, transform_indices = @transform_12, window_bounds = array<i64: 1, 64>}, {pipeline_mode = #tpu.pipeline_mode<synchronous>, transform_indices = @transform_13, window_bounds = array<i64: 64, 512>}, {pipeline_mode = #tpu.pipeline_mode<synchronous>, transform_indices = @transform_14, window_bounds = array<i64: 1, 512>}, {pipeline_mode = #tpu.pipeline_mode<synchronous>, transform_indices = @transform_15, window_bounds = array<i64: 512, 64>}, {pipeline_mode = #tpu.pipeline_mode<synchronous>, transform_indices = @transform_16, window_bounds = array<i64: 1, 64>}, {transform_indices = @transform_17, window_bounds = array<i64: 1, 1, 128>}]} {
    %c0 = arith.constant 0 : index
    %c0_0 = arith.constant 0 : index
    %c0_1 = arith.constant 0 : index
    %0 = vector.load %arg2[%c0, %c0_0, %c0_1] : memref<1x2x64xf32, #tpu.memory_space<vmem>>, vector<1x2x64xf32>
    %1 = vector.shape_cast %0 : vector<1x2x64xf32> to vector<2x64xf32>
    %c0_2 = arith.constant 0 : index
    %c0_3 = arith.constant 0 : index
    %c0_4 = arith.constant 0 : index
    %2 = vector.load %arg3[%c0_2, %c0_3, %c0_4] : memref<1x32x1xi32, #tpu.memory_space<vmem>>, vector<1x32x1xi32>
    %3 = vector.shape_cast %2 : vector<1x32x1xi32> to vector<32x1xi32>
    %c0_5 = arith.constant 0 : index
    %c0_6 = arith.constant 0 : index
    %4 = vector.load %arg4[%c0_5, %c0_6] : memref<32x2xf32, #tpu.memory_space<vmem>>, vector<32x2xf32>
    %c0_7 = arith.constant 0 : index
    %c0_8 = arith.constant 0 : index
    %5 = vector.load %arg5[%c0_7, %c0_8] : memref<2x32xf32, #tpu.memory_space<vmem>>, vector<2x32xf32>
    %6 = tpu.iota {dimensions = array<i32: 0>} : vector<32x1xi32>
    %c15_i32 = arith.constant 15 : i32
    %7 = vector.broadcast %c15_i32 : i32 to vector<32x1xi32>
    %8 = arith.andi %6, %7 : vector<32x1xi32>
    %9 = arith.cmpi eq, %3, %8 : vector<32x1xi32>
    %10 = arith.extui %9 : vector<32x1xi1> to vector<32x1xi32>
    %11 = arith.sitofp %10 : vector<32x1xi32> to vector<32x1xf32>
    %12 = tpu.iota {dimensions = array<i32: 1>} : vector<32x16xi32>
    %13 = vector.broadcast %3 : vector<32x1xi32> to vector<32x16xi32>
    %14 = arith.cmpi eq, %13, %12 : vector<32x16xi32>
    %15 = arith.extui %14 : vector<32x16xi1> to vector<32x16xi32>
    %16 = arith.sitofp %15 : vector<32x16xi32> to vector<32x16xf32>
    %c0_9 = arith.constant 0 : index
    %c0_10 = arith.constant 0 : index
    %17 = vector.load %arg7[%c0_9, %c0_10] : memref<16x16xf32, #tpu.memory_space<vmem>>, vector<16x16xf32>
    %18 = tpu.concatenate %17, %17 in 0 : vector<16x16xf32>, vector<16x16xf32> -> vector<32x16xf32>
    %19 = arith.mulf %18, %16 : vector<32x16xf32>
    %cst = arith.constant dense<0.000000e+00> : vector<32xf32>
    %20 = vector.multi_reduction <add>, %19, %cst [1] : vector<32x16xf32> to vector<32xf32>
    %21 = vector.shape_cast %20 : vector<32xf32> to vector<32x1xf32>
    %c2_i32 = arith.constant 2 : i32
    %22 = arith.muli %arg0, %c2_i32 : i32
    %c0_i32 = arith.constant 0 : i32
    %23 = arith.addi %22, %c0_i32 : i32
    %24 = arith.index_cast %23 : i32 to index
    %25 = memref.load %arg1[%24] : memref<2xi32, #tpu.memory_space<smem>>
    %26 = arith.index_cast %25 : i32 to index
    %c0_11 = arith.constant 0 : index
    %c0_12 = arith.constant 0 : index
    %27 = vector.load %arg6[%26, %c0_11, %c0_12] : memref<16x16x384xf32, #tpu.memory_space<vmem>>, vector<1x16x384xf32>
    %28 = vector.shape_cast %27 : vector<1x16x384xf32> to vector<16x384xf32>
    %c2_i32_13 = arith.constant 2 : i32
    %29 = arith.muli %arg0, %c2_i32_13 : i32
    %c1_i32 = arith.constant 1 : i32
    %30 = arith.addi %29, %c1_i32 : i32
    %31 = arith.index_cast %30 : i32 to index
    %32 = memref.load %arg1[%31] : memref<2xi32, #tpu.memory_space<smem>>
    %33 = arith.index_cast %32 : i32 to index
    %c0_14 = arith.constant 0 : index
    %c0_15 = arith.constant 0 : index
    %34 = vector.load %arg6[%33, %c0_14, %c0_15] : memref<16x16x384xf32, #tpu.memory_space<vmem>>, vector<1x16x384xf32>
    %35 = vector.shape_cast %34 : vector<1x16x384xf32> to vector<16x384xf32>
    %36 = tpu.concatenate %28, %35 in 0 : vector<16x384xf32>, vector<16x384xf32> -> vector<32x384xf32>
    %c0_16 = arith.constant 0 : index
    %c0_17 = arith.constant 0 : index
    %37 = vector.load %arg9[%c0_16, %c0_17] : memref<64x384xf32, #tpu.memory_space<vmem>>, vector<64x384xf32>
    %cst_18 = arith.constant dense<0.000000e+00> : vector<2x384xf32>
    %38 = tpu.matmul %1, %37, %cst_18 {dimension_numbers = #tpu.dot_dimension_numbers<[1], [0], [0], [1], [0, 0, 1, 1], [], []>} : vector<2x64xf32>, vector<64x384xf32>, vector<2x384xf32> -> vector<2x384xf32>
    %cst_19 = arith.constant dense<0.000000e+00> : vector<32x384xf32>
    %39 = tpu.matmul %4, %38, %cst_19 {dimension_numbers = #tpu.dot_dimension_numbers<[1], [0], [0], [1], [0, 0, 1, 1], [], []>} : vector<32x2xf32>, vector<2x384xf32>, vector<32x384xf32> -> vector<32x384xf32>
    %40 = arith.addf %36, %39 : vector<32x384xf32>
    %c0_20 = arith.constant 0 : index
    %c0_21 = arith.constant 0 : index
    %41 = vector.load %arg10[%c0_20, %c0_21] : memref<1x384xf32, #tpu.memory_space<vmem>>, vector<1x384xf32>
    %42 = vector.broadcast %41 : vector<1x384xf32> to vector<32x384xf32>
    %43 = arith.addf %40, %42 : vector<32x384xf32>
    %cst_22 = arith.constant 0.000000e+00 : f32
    %44 = vector.broadcast %cst_22 : f32 to vector<32x384xf32>
    %45 = arith.maximumf %43, %44 : vector<32x384xf32>
    %c0_23 = arith.constant 0 : index
    %c0_24 = arith.constant 0 : index
    %46 = vector.load %arg11[%c0_23, %c0_24] : memref<1x384xf32, #tpu.memory_space<vmem>>, vector<1x384xf32>
    %47 = vector.broadcast %46 : vector<1x384xf32> to vector<32x384xf32>
    %48 = arith.mulf %45, %47 : vector<32x384xf32>
    %cst_25 = arith.constant dense<0.000000e+00> : vector<32xf32>
    %49 = vector.multi_reduction <add>, %48, %cst_25 [1] : vector<32x384xf32> to vector<32xf32>
    %50 = vector.shape_cast %49 : vector<32xf32> to vector<32x1xf32>
    %c0_26 = arith.constant 0 : index
    %c0_27 = arith.constant 0 : index
    %51 = vector.load %arg12[%c0_26, %c0_27] : memref<1x1xf32, #tpu.memory_space<vmem>>, vector<1x1xf32>
    %52 = vector.broadcast %51 : vector<1x1xf32> to vector<32x1xf32>
    %53 = arith.addf %50, %52 : vector<32x1xf32>
    %54 = arith.mulf %21, %53 : vector<32x1xf32>
    %cst_28 = arith.constant 1.000000e+00 : f32
    %55 = vector.broadcast %cst_28 : f32 to vector<32x1xf32>
    %56 = arith.subf %55, %11 : vector<32x1xf32>
    %57 = arith.mulf %54, %56 : vector<32x1xf32>
    %58 = arith.addf %57, %11 : vector<32x1xf32>
    %c0_29 = arith.constant 0 : index
    %c0_30 = arith.constant 0 : index
    %59 = vector.load %arg13[%c0_29, %c0_30] : memref<64x64xf32, #tpu.memory_space<vmem>>, vector<64x64xf32>
    %cst_31 = arith.constant dense<0.000000e+00> : vector<2x64xf32>
    %60 = tpu.matmul %1, %59, %cst_31 {dimension_numbers = #tpu.dot_dimension_numbers<[1], [0], [0], [1], [0, 0, 1, 1], [], []>} : vector<2x64xf32>, vector<64x64xf32>, vector<2x64xf32> -> vector<2x64xf32>
    %cst_32 = arith.constant dense<0.000000e+00> : vector<32x64xf32>
    %61 = tpu.matmul %4, %60, %cst_32 {dimension_numbers = #tpu.dot_dimension_numbers<[1], [0], [0], [1], [0, 0, 1, 1], [], []>} : vector<32x2xf32>, vector<2x64xf32>, vector<32x64xf32> -> vector<32x64xf32>
    %c0_33 = arith.constant 0 : index
    %c0_34 = arith.constant 0 : index
    %62 = vector.load %arg8[%c0_33, %c0_34] : memref<16x64xf32, #tpu.memory_space<vmem>>, vector<16x64xf32>
    %63 = tpu.concatenate %62, %62 in 0 : vector<16x64xf32>, vector<16x64xf32> -> vector<32x64xf32>
    %64 = vector.shape_cast %9 : vector<32x1xi1> to vector<32x1xi1>
    %65 = vector.broadcast %64 : vector<32x1xi1> to vector<32x64xi1>
    %66 = arith.select %65, %61, %63 : vector<32x64xi1>, vector<32x64xf32>
    %c0_35 = arith.constant 0 : index
    %c0_36 = arith.constant 0 : index
    %67 = vector.load %arg14[%c0_35, %c0_36] : memref<1x64xf32, #tpu.memory_space<vmem>>, vector<1x64xf32>
    %68 = vector.broadcast %67 : vector<1x64xf32> to vector<32x64xf32>
    %69 = arith.addf %66, %68 : vector<32x64xf32>
    %cst_37 = arith.constant 0.000000e+00 : f32
    %70 = vector.broadcast %cst_37 : f32 to vector<32x64xf32>
    %71 = arith.maximumf %69, %70 : vector<32x64xf32>
    %72 = vector.broadcast %58 : vector<32x1xf32> to vector<32x64xf32>
    %73 = arith.mulf %72, %71 : vector<32x64xf32>
    %cst_38 = arith.constant dense<0.000000e+00> : vector<2x64xf32>
    %74 = tpu.matmul %5, %73, %cst_38 {dimension_numbers = #tpu.dot_dimension_numbers<[1], [0], [0], [1], [0, 0, 1, 1], [], []>} : vector<2x32xf32>, vector<32x64xf32>, vector<2x64xf32> -> vector<2x64xf32>
    %c0_39 = arith.constant 0 : index
    %c0_40 = arith.constant 0 : index
    %75 = vector.load %arg15[%c0_39, %c0_40] : memref<64x512xf32, #tpu.memory_space<vmem>>, vector<64x512xf32>
    %cst_41 = arith.constant dense<0.000000e+00> : vector<2x512xf32>
    %76 = tpu.matmul %74, %75, %cst_41 {dimension_numbers = #tpu.dot_dimension_numbers<[1], [0], [0], [1], [0, 0, 1, 1], [], []>} : vector<2x64xf32>, vector<64x512xf32>, vector<2x512xf32> -> vector<2x512xf32>
    %c0_42 = arith.constant 0 : index
    %c0_43 = arith.constant 0 : index
    %77 = vector.load %arg16[%c0_42, %c0_43] : memref<1x512xf32, #tpu.memory_space<vmem>>, vector<1x512xf32>
    %78 = vector.broadcast %77 : vector<1x512xf32> to vector<2x512xf32>
    %79 = arith.addf %76, %78 : vector<2x512xf32>
    %cst_44 = arith.constant 0.000000e+00 : f32
    %80 = vector.broadcast %cst_44 : f32 to vector<2x512xf32>
    %81 = arith.maximumf %79, %80 : vector<2x512xf32>
    %c0_45 = arith.constant 0 : index
    %c0_46 = arith.constant 0 : index
    %82 = vector.load %arg17[%c0_45, %c0_46] : memref<512x64xf32, #tpu.memory_space<vmem>>, vector<512x64xf32>
    %cst_47 = arith.constant dense<0.000000e+00> : vector<2x64xf32>
    %83 = tpu.matmul %81, %82, %cst_47 {dimension_numbers = #tpu.dot_dimension_numbers<[1], [0], [0], [1], [0, 0, 1, 1], [], []>} : vector<2x512xf32>, vector<512x64xf32>, vector<2x64xf32> -> vector<2x64xf32>
    %c0_48 = arith.constant 0 : index
    %c0_49 = arith.constant 0 : index
    %84 = vector.load %arg18[%c0_48, %c0_49] : memref<1x64xf32, #tpu.memory_space<vmem>>, vector<1x64xf32>
    %85 = vector.broadcast %84 : vector<1x64xf32> to vector<2x64xf32>
    %86 = arith.addf %83, %85 : vector<2x64xf32>
    %87 = vector.extract_strided_slice %86 {offsets = [0, 0], sizes = [1, 64], strides = [1, 1]} : vector<2x64xf32> to vector<1x64xf32>
    %88 = vector.extract_strided_slice %86 {offsets = [1, 0], sizes = [1, 64], strides = [1, 1]} : vector<2x64xf32> to vector<1x64xf32>
    %89 = tpu.concatenate %87, %88 in 1 : vector<1x64xf32>, vector<1x64xf32> -> vector<1x128xf32>
    %c0_50 = arith.constant 0 : index
    %c0_51 = arith.constant 0 : index
    %c0_52 = arith.constant 0 : index
    %90 = vector.load %arg19[%c0_50, %c0_51, %c0_52] : memref<1x1x128xf32, #tpu.memory_space<vmem>>, vector<1x1x128xf32>
    %91 = vector.shape_cast %90 : vector<1x1x128xf32> to vector<1x128xf32>
    %92 = vector.shape_cast %89 : vector<1x128xf32> to vector<1x1x128xf32>
    tpu.vector_store %arg19[%c0_50, %c0_51, %c0_52], %92 {strides = array<i32>} : memref<1x1x128xf32, #tpu.memory_space<vmem>>, vector<1x1x128xf32>,
    return
  }
  func.func @transform_0(%arg0: i32, %arg1: memref<2xi32, #tpu.memory_space<smem>>) -> (i32, i32, i32) {
    %c0_i32 = arith.constant 0 : i32
    %c0_i32_0 = arith.constant 0 : i32
    %c0_i32_1 = arith.constant 0 : i32
    return %arg0, %c0_i32, %c0_i32_0 : i32, i32, i32
  }
  func.func @transform_1(%arg0: i32, %arg1: memref<2xi32, #tpu.memory_space<smem>>) -> (i32, i32, i32) {
    %c0_i32 = arith.constant 0 : i32
    %c0_i32_0 = arith.constant 0 : i32
    %c0_i32_1 = arith.constant 0 : i32
    return %arg0, %c0_i32, %c0_i32_0 : i32, i32, i32
  }
  func.func @transform_2(%arg0: i32, %arg1: memref<2xi32, #tpu.memory_space<smem>>) -> (i32, i32) {
    %c0_i32 = arith.constant 0 : i32
    %c0_i32_0 = arith.constant 0 : i32
    %c0_i32_1 = arith.constant 0 : i32
    return %c0_i32, %c0_i32_0 : i32, i32
  }
  func.func @transform_3(%arg0: i32, %arg1: memref<2xi32, #tpu.memory_space<smem>>) -> (i32, i32) {
    %c0_i32 = arith.constant 0 : i32
    %c0_i32_0 = arith.constant 0 : i32
    %c0_i32_1 = arith.constant 0 : i32
    return %c0_i32, %c0_i32_0 : i32, i32
  }
  func.func @transform_4(%arg0: i32, %arg1: memref<2xi32, #tpu.memory_space<smem>>) -> (i32, i32, i32) {
    %c0_i32 = arith.constant 0 : i32
    %c0_i32_0 = arith.constant 0 : i32
    %c0_i32_1 = arith.constant 0 : i32
    %c0_i32_2 = arith.constant 0 : i32
    return %c0_i32, %c0_i32_0, %c0_i32_1 : i32, i32, i32
  }
  func.func @transform_5(%arg0: i32, %arg1: memref<2xi32, #tpu.memory_space<smem>>) -> (i32, i32) {
    %c0_i32 = arith.constant 0 : i32
    %c0_i32_0 = arith.constant 0 : i32
    %c0_i32_1 = arith.constant 0 : i32
    return %c0_i32, %c0_i32_0 : i32, i32
  }
  func.func @transform_6(%arg0: i32, %arg1: memref<2xi32, #tpu.memory_space<smem>>) -> (i32, i32) {
    %c0_i32 = arith.constant 0 : i32
    %c0_i32_0 = arith.constant 0 : i32
    %c0_i32_1 = arith.constant 0 : i32
    return %c0_i32, %c0_i32_0 : i32, i32
  }
  func.func @transform_7(%arg0: i32, %arg1: memref<2xi32, #tpu.memory_space<smem>>) -> (i32, i32) {
    %c0_i32 = arith.constant 0 : i32
    %c0_i32_0 = arith.constant 0 : i32
    %c0_i32_1 = arith.constant 0 : i32
    return %c0_i32, %c0_i32_0 : i32, i32
  }
  func.func @transform_8(%arg0: i32, %arg1: memref<2xi32, #tpu.memory_space<smem>>) -> (i32, i32) {
    %c0_i32 = arith.constant 0 : i32
    %c0_i32_0 = arith.constant 0 : i32
    %c0_i32_1 = arith.constant 0 : i32
    return %c0_i32, %c0_i32_0 : i32, i32
  }
  func.func @transform_9(%arg0: i32, %arg1: memref<2xi32, #tpu.memory_space<smem>>) -> (i32, i32) {
    %c0_i32 = arith.constant 0 : i32
    %c0_i32_0 = arith.constant 0 : i32
    %c0_i32_1 = arith.constant 0 : i32
    return %c0_i32, %c0_i32_0 : i32, i32
  }
  func.func @transform_10(%arg0: i32, %arg1: memref<2xi32, #tpu.memory_space<smem>>) -> (i32, i32) {
    %c0_i32 = arith.constant 0 : i32
    %c0_i32_0 = arith.constant 0 : i32
    %c0_i32_1 = arith.constant 0 : i32
    return %c0_i32, %c0_i32_0 : i32, i32
  }
  func.func @transform_11(%arg0: i32, %arg1: memref<2xi32, #tpu.memory_space<smem>>) -> (i32, i32) {
    %c0_i32 = arith.constant 0 : i32
    %c0_i32_0 = arith.constant 0 : i32
    %c0_i32_1 = arith.constant 0 : i32
    return %c0_i32, %c0_i32_0 : i32, i32
  }
  func.func @transform_12(%arg0: i32, %arg1: memref<2xi32, #tpu.memory_space<smem>>) -> (i32, i32) {
    %c0_i32 = arith.constant 0 : i32
    %c0_i32_0 = arith.constant 0 : i32
    %c0_i32_1 = arith.constant 0 : i32
    return %c0_i32, %c0_i32_0 : i32, i32
  }
  func.func @transform_13(%arg0: i32, %arg1: memref<2xi32, #tpu.memory_space<smem>>) -> (i32, i32) {
    %c0_i32 = arith.constant 0 : i32
    %c0_i32_0 = arith.constant 0 : i32
    %c0_i32_1 = arith.constant 0 : i32
    return %c0_i32, %c0_i32_0 : i32, i32
  }
  func.func @transform_14(%arg0: i32, %arg1: memref<2xi32, #tpu.memory_space<smem>>) -> (i32, i32) {
    %c0_i32 = arith.constant 0 : i32
    %c0_i32_0 = arith.constant 0 : i32
    %c0_i32_1 = arith.constant 0 : i32
    return %c0_i32, %c0_i32_0 : i32, i32
  }
  func.func @transform_15(%arg0: i32, %arg1: memref<2xi32, #tpu.memory_space<smem>>) -> (i32, i32) {
    %c0_i32 = arith.constant 0 : i32
    %c0_i32_0 = arith.constant 0 : i32
    %c0_i32_1 = arith.constant 0 : i32
    return %c0_i32, %c0_i32_0 : i32, i32
  }
  func.func @transform_16(%arg0: i32, %arg1: memref<2xi32, #tpu.memory_space<smem>>) -> (i32, i32) {
    %c0_i32 = arith.constant 0 : i32
    %c0_i32_0 = arith.constant 0 : i32
    %c0_i32_1 = arith.constant 0 : i32
    return %c0_i32, %c0_i32_0 : i32, i32
  }
  func.func @transform_17(%arg0: i32, %arg1: memref<2xi32, #tpu.memory_space<smem>>) -> (i32, i32, i32) {
    %c0_i32 = arith.constant 0 : i32
    %c0_i32_0 = arith.constant 0 : i32
    %c0_i32_1 = arith.constant 0 : i32
    return %arg0, %c0_i32, %c0_i32_0 : i32, i32, i32
  }
}

</mosaic_0001>

<llo_original>
// kernel: protocom_forward.1
$region0: #{protocom_forward.1}
  #allocation0 [shape = 'u32[]', space=smem, size = 0x4, offset = 0x4, fixed_abs, tag = 'smem constant byte address 0x4 - core index']
  #allocation1 [shape = 'u32[144,128]{1,0:T(1,128)}', space=vmem, size = 0x12000, scoped, tag = 'internal scratch']
  #allocation2 [shape = 's32[1]{0}', space=sflag, size = 0x4, scoped, tag = 'scoped memory for protocom_forward.1']
  #allocation3 [shape = 'u8[512]{0}', space=smem, size = 0x200, scoped, tag = 'prefetched SMEM operand 0']
  #allocation4 [shape = 'f32[1,1]{1,0:T(1,128)S(1)}', space=vmem, size = 0x200, scoped, tag = 'scoped memory for protocom_forward.1']
  %s0 = inlined_call_operand.vmem [shape: s32[2], index: 0, kind: input, shape index: {}]
  %s1 = inlined_call_operand.vmem [shape: f32[1,2,64], index: 1, kind: input, shape index: {}]
  %s2 = inlined_call_operand.vmem [shape: s32[1,32,1], index: 2, kind: input, shape index: {}]
  %s3 = inlined_call_operand.vmem [shape: f32[32,2], index: 3, kind: input, shape index: {}]
  %s4 = inlined_call_operand.vmem [shape: f32[2,32], index: 4, kind: input, shape index: {}]
  %s5 = inlined_call_operand.vmem [shape: f32[16,16,384], index: 5, kind: input, shape index: {}]
  %s6 = inlined_call_operand.vmem [shape: f32[16,16], index: 6, kind: input, shape index: {}]
  %s7 = inlined_call_operand.hbm [shape: f32[16,64], index: 7, kind: input, shape index: {}]
  %s8 = inlined_call_operand.hbm [shape: f32[64,384], index: 8, kind: input, shape index: {}]
  %s9 = inlined_call_operand.hbm [shape: f32[1,384], index: 9, kind: input, shape index: {}]
  %s10 = inlined_call_operand.hbm [shape: f32[1,384], index: 10, kind: input, shape index: {}]
  %s11 = inlined_call_operand.<no memory space> [shape: f32[1,1], index: 11, kind: input, shape index: {}]
  %s12 = inlined_call_operand.hbm [shape: f32[64,64], index: 12, kind: input, shape index: {}]
  %s13 = inlined_call_operand.hbm [shape: f32[1,64], index: 13, kind: input, shape index: {}]
  %s14 = inlined_call_operand.hbm [shape: f32[64,512], index: 14, kind: input, shape index: {}]
  %s15 = inlined_call_operand.hbm [shape: f32[1,512], index: 15, kind: input, shape index: {}]
  %s16 = inlined_call_operand.vmem [shape: f32[512,64], index: 16, kind: input, shape index: {}]
  %s17 = inlined_call_operand.hbm [shape: f32[1,64], index: 17, kind: input, shape index: {}]
  %s18 = inlined_call_operand.vmem [shape: f32[1,1,128], index: 18, kind: output, shape index: {}]
  %s19 = sld [smem:[#allocation0]]
  $region114: #{protocom_forward.1} parent=0
    _
  %s21 = ssub.s32 1, %s19
  %s22 = scalar_select 0, %s21, %s19
  %s23 = sshll.u32 %s0, 4
  %s24 = int_to_ptr.vmem [resolvable:$true] %s23
  %26 = dma.vmem_to_smem %s24, 16, [#allocation3], [#allocation2]
  %v27 = vstv %s11
  %28 = vst [vmem:[#allocation4] sm:$0x1] %v27
  %29 = dma.done [#allocation2], 16
  %30 = sfence
  $region1: #{protocom_forward.1} parent=0
    #allocation5 [shape = 'u8[8192]{0}', space=vmem, size = 0x2000, scoped, tag = 'input window, operand 7, single buffered']
    #allocation6 [shape = 's32[1]{0}', space=sflag, size = 0x4, scoped, tag = 'scoped memory for protocom_forward.1']
    #allocation7 [shape = 'u8[98304]{0}', space=vmem, size = 0x18000, scoped, tag = 'input window, operand 8, single buffered']
    #allocation8 [shape = 's32[1]{0}', space=sflag, size = 0x4, scoped, tag = 'scoped memory for protocom_forward.1']
    #allocation9 [shape = 'u8[1536]{0}', space=vmem, size = 0x800, scoped, tag = 'input window, operand 9, single buffered']
    #allocation10 [shape = 'u8[1536]{0}', space=vmem, size = 0x800, scoped, tag = 'input window, operand 10, single buffered']
    #allocation11 [shape = 's32[1]{0}', space=sflag, size = 0x4, scoped, tag = 'scoped memory for protocom_forward.1']
    #allocation12 [shape = 'u8[32768]{0}', space=vmem, size = 0x8000, scoped, tag = 'input window, operand 12, single buffered']
    #allocation13 [shape = 'u8[512]{0}', space=vmem, size = 0x400, scoped, tag = 'input window, operand 13, single buffered']
    #allocation14 [shape = 's32[1]{0}', space=sflag, size = 0x4, scoped, tag = 'scoped memory for protocom_forward.1']
    #allocation15 [shape = 'u8[131072]{0}', space=vmem, size = 0x20000, scoped, tag = 'input window, operand 14, single buffered']
    #allocation16 [shape = 'u8[2048]{0}', space=vmem, size = 0x800, scoped, tag = 'input window, operand 15, single buffered']
    #allocation17 [shape = 's32[1]{0}', space=sflag, size = 0x4, scoped, tag = 'scoped memory for protocom_forward.1']
    #allocation18 [shape = 'u8[512]{0}', space=vmem, size = 0x400, scoped, tag = 'input window, operand 17, single buffered']
    %31 = vsyncpa [#allocation6], 0
    %32 = vsyncpa [#allocation8], 0
    %33 = vsyncpa [#allocation11], 0
    %34 = vsyncpa [#allocation14], 0
    %35 = vsyncpa [#allocation17], 0
    // Predicated region
    $region2: #{protocom_forward.1} parent=1 // pred_check
      _
    $region3: #{protocom_forward.1} parent=1 // pred_check_branch
      %37 = sbr.rel (0) target = $region5
    $region4: #{protocom_forward.1} parent=1 // pred_region
      _
    $region5: #{protocom_forward.1} parent=1 // pred_fallthru
      _
    // Predicated region
    $region6: #{protocom_forward.1} parent=1 // pred_check
      _
    $region7: #{protocom_forward.1} parent=1 // pred_check_branch
      %39 = sbr.rel (0) target = $region9
    $region8: #{protocom_forward.1} parent=1 // pred_region
      _
    $region9: #{protocom_forward.1} parent=1 // pred_fallthru
      _
    // Predicated region
    $region10: #{protocom_forward.1} parent=1 // pred_check
      _
    $region11: #{protocom_forward.1} parent=1 // pred_check_branch
      %41 = sbr.rel (0) target = $region13
    $region12: #{protocom_forward.1} parent=1 // pred_region
      _
    $region13: #{protocom_forward.1} parent=1 // pred_fallthru
      _
    // Predicated region
    $region14: #{protocom_forward.1} parent=1 // pred_check
      _
    $region15: #{protocom_forward.1} parent=1 // pred_check_branch
      %43 = sbr.rel (0) target = $region17
    $region16: #{protocom_forward.1} parent=1 // pred_region
      _
    $region17: #{protocom_forward.1} parent=1 // pred_fallthru
      _
    // Predicated region
    $region18: #{protocom_forward.1} parent=1 // pred_check
      _
    $region19: #{protocom_forward.1} parent=1 // pred_check_branch
      %45 = sbr.rel (0) target = $region21
    $region20: #{protocom_forward.1} parent=1 // pred_region
      _
    $region21: #{protocom_forward.1} parent=1 // pred_fallthru
      _
    // Predicated region
    $region22: #{protocom_forward.1} parent=1 // pred_check
      _
    $region23: #{protocom_forward.1} parent=1 // pred_check_branch
      %47 = sbr.rel (0) target = $region25
    $region24: #{protocom_forward.1} parent=1 // pred_region
      _
    $region25: #{protocom_forward.1} parent=1 // pred_fallthru
      _
    // Predicated region
    $region26: #{protocom_forward.1} parent=1 // pred_check
      _
    $region27: #{protocom_forward.1} parent=1 // pred_check_branch
      %49 = sbr.rel (0) target = $region29
    $region28: #{protocom_forward.1} parent=1 // pred_region
      %s51 = ssub.s32 256, 256
      %52 = vsyncadd [#allocation6], %s51
      %s53 = sshll.u32 [#allocation5], 4
      %s54 = int_to_ptr.vmem [resolvable:$true] %s53
      %59 = dma.hbm_to_vmem [thread:$0]  %s7, 256, %s54, [#allocation6], 128, 128, 8
    $region29: #{protocom_forward.1} parent=1 // pred_fallthru
      _
    // Predicated region
    $region30: #{protocom_forward.1} parent=1 // pred_check
      _
    $region31: #{protocom_forward.1} parent=1 // pred_check_branch
      %61 = sbr.rel (0) target = $region33
    $region32: #{protocom_forward.1} parent=1 // pred_region
      %s63 = ssub.s32 3072, 3072
      %64 = vsyncadd [#allocation8], %s63
      %s65 = sshll.u32 [#allocation7], 4
      %s66 = int_to_ptr.vmem [resolvable:$true] %s65
      %71 = dma.hbm_to_vmem [thread:$0]  %s8, 3072, %s66, [#allocation8], 384, 384, 24
    $region33: #{protocom_forward.1} parent=1 // pred_fallthru
      _
    // Predicated region
    $region34: #{protocom_forward.1} parent=1 // pred_check
      _
    $region35: #{protocom_forward.1} parent=1 // pred_check_branch
      %73 = sbr.rel (0) target = $region37
    $region36: #{protocom_forward.1} parent=1 // pred_region
      %s75 = ssub.s32 48, 48
      %76 = vsyncadd [#allocation8], %s75
      %s78 = sshll.u32 [#allocation9], 4
      %s79 = int_to_ptr.vmem [resolvable:$true] %s78
      %81 = dma.hbm_to_vmem [thread:$0]  %s9, 48, %s79, [#allocation8]
    $region37: #{protocom_forward.1} parent=1 // pred_fallthru
      _
    // Predicated region
    $region38: #{protocom_forward.1} parent=1 // pred_check
      _
    $region39: #{protocom_forward.1} parent=1 // pred_check_branch
      %83 = sbr.rel (0) target = $region41
    $region40: #{protocom_forward.1} parent=1 // pred_region
      %s85 = ssub.s32 48, 48
      %86 = vsyncadd [#allocation11], %s85
      %s88 = sshll.u32 [#allocation10], 4
      %s89 = int_to_ptr.vmem [resolvable:$true] %s88
      %91 = dma.hbm_to_vmem [thread:$0]  %s10, 48, %s89, [#allocation11]
    $region41: #{protocom_forward.1} parent=1 // pred_fallthru
      _
    // Predicated region
    $region42: #{protocom_forward.1} parent=1 // pred_check
      _
    $region43: #{protocom_forward.1} parent=1 // pred_check_branch
      %93 = sbr.rel (0) target = $region45
    $region44: #{protocom_forward.1} parent=1 // pred_region
      _
    $region45: #{protocom_forward.1} parent=1 // pred_fallthru
      _
    // Predicated region
    $region46: #{protocom_forward.1} parent=1 // pred_check
      _
    $region47: #{protocom_forward.1} parent=1 // pred_check_branch
      %95 = sbr.rel (0) target = $region49
    $region48: #{protocom_forward.1} parent=1 // pred_region
      %s97 = ssub.s32 1024, 1024
      %98 = vsyncadd [#allocation11], %s97
      %s99 = sshll.u32 [#allocation12], 4
      %s100 = int_to_ptr.vmem [resolvable:$true] %s99
      %105 = dma.hbm_to_vmem [thread:$0]  %s12, 1024, %s100, [#allocation11], 128, 128, 8
    $region49: #{protocom_forward.1} parent=1 // pred_fallthru
      _
    // Predicated region
    $region50: #{protocom_forward.1} parent=1 // pred_check
      _
    $region51: #{protocom_forward.1} parent=1 // pred_check_branch
      %107 = sbr.rel (0) target = $region53
    $region52: #{protocom_forward.1} parent=1 // pred_region
      %s109 = ssub.s32 16, 16
      %110 = vsyncadd [#allocation14], %s109
      %s112 = sshll.u32 [#allocation13], 4
      %s113 = int_to_ptr.vmem [resolvable:$true] %s112
      %115 = dma.hbm_to_vmem [thread:$0]  %s13, 16, %s113, [#allocation14]
    $region53: #{protocom_forward.1} parent=1 // pred_fallthru
      _
    // Predicated region
    $region54: #{protocom_forward.1} parent=1 // pred_check
      _
    $region55: #{protocom_forward.1} parent=1 // pred_check_branch
      %117 = sbr.rel (0) target = $region57
    $region56: #{protocom_forward.1} parent=1 // pred_region
      %s119 = ssub.s32 4096, 4096
      %120 = vsyncadd [#allocation14], %s119
      %s121 = sshll.u32 [#allocation15], 4
      %s122 = int_to_ptr.vmem [resolvable:$true] %s121
      %127 = dma.hbm_to_vmem [thread:$0]  %s14, 4096, %s122, [#allocation14], 512, 512, 32
    $region57: #{protocom_forward.1} parent=1 // pred_fallthru
      _
    // Predicated region
    $region58: #{protocom_forward.1} parent=1 // pred_check
      _
    $region59: #{protocom_forward.1} parent=1 // pred_check_branch
      %129 = sbr.rel (0) target = $region61
    $region60: #{protocom_forward.1} parent=1 // pred_region
      %s131 = ssub.s32 64, 64
      %132 = vsyncadd [#allocation17], %s131
      %s134 = sshll.u32 [#allocation16], 4
      %s135 = int_to_ptr.vmem [resolvable:$true] %s134
      %137 = dma.hbm_to_vmem [thread:$0]  %s15, 64, %s135, [#allocation17]
    $region61: #{protocom_forward.1} parent=1 // pred_fallthru
      _
    // Predicated region
    $region62: #{protocom_forward.1} parent=1 // pred_check
      _
    $region63: #{protocom_forward.1} parent=1 // pred_check_branch
      %139 = sbr.rel (0) target = $region65
    $region64: #{protocom_forward.1} parent=1 // pred_region
      _
    $region65: #{protocom_forward.1} parent=1 // pred_fallthru
      _
    // Predicated region
    $region66: #{protocom_forward.1} parent=1 // pred_check
      _
    $region67: #{protocom_forward.1} parent=1 // pred_check_branch
      %141 = sbr.rel (0) target = $region69
    $region68: #{protocom_forward.1} parent=1 // pred_region
      %s143 = ssub.s32 16, 16
      %144 = vsyncadd [#allocation17], %s143
      %s146 = sshll.u32 [#allocation18], 4
      %s147 = int_to_ptr.vmem [resolvable:$true] %s146
      %149 = dma.hbm_to_vmem [thread:$0]  %s17, 16, %s147, [#allocation17]
    $region69: #{protocom_forward.1} parent=1 // pred_fallthru
      _
    // Predicated region
    $region70: #{protocom_forward.1} parent=1 // pred_check
      _
    $region71: #{protocom_forward.1} parent=1 // pred_check_branch
      %151 = sbr.rel (0) target = $region73
    $region72: #{protocom_forward.1} parent=1 // pred_region
      %152 = dma.done [#allocation6], 256
    $region73: #{protocom_forward.1} parent=1 // pred_fallthru
      _
    // Predicated region
    $region74: #{protocom_forward.1} parent=1 // pred_check
      _
    $region75: #{protocom_forward.1} parent=1 // pred_check_branch
      %154 = sbr.rel (0) target = $region77
    $region76: #{protocom_forward.1} parent=1 // pred_region
      %155 = dma.done [#allocation8], 3072
    $region77: #{protocom_forward.1} parent=1 // pred_fallthru
      _
    // Predicated region
    $region78: #{protocom_forward.1} parent=1 // pred_check
      _
    $region79: #{protocom_forward.1} parent=1 // pred_check_branch
      %157 = sbr.rel (0) target = $region81
    $region80: #{protocom_forward.1} parent=1 // pred_region
      %158 = dma.done [#allocation8], 48
    $region81: #{protocom_forward.1} parent=1 // pred_fallthru
      _
    // Predicated region
    $region82: #{protocom_forward.1} parent=1 // pred_check
      _
    $region83: #{protocom_forward.1} parent=1 // pred_check_branch
      %160 = sbr.rel (0) target = $region85
    $region84: #{protocom_forward.1} parent=1 // pred_region
      %161 = dma.done [#allocation11], 48
    $region85: #{protocom_forward.1} parent=1 // pred_fallthru
      _
    // Predicated region
    $region86: #{protocom_forward.1} parent=1 // pred_check
      _
    $region87: #{protocom_forward.1} parent=1 // pred_check_branch
      %163 = sbr.rel (0) target = $region89
    $region88: #{protocom_forward.1} parent=1 // pred_region
      %164 = dma.done [#allocation11], 1024
    $region89: #{protocom_forward.1} parent=1 // pred_fallthru
      _
    // Predicated region
    $region90: #{protocom_forward.1} parent=1 // pred_check
      _
    $region91: #{protocom_forward.1} parent=1 // pred_check_branch
      %166 = sbr.rel (0) target = $region93
    $region92: #{protocom_forward.1} parent=1 // pred_region
      %167 = dma.done [#allocation14], 16
    $region93: #{protocom_forward.1} parent=1 // pred_fallthru
      _
    // Predicated region
    $region94: #{protocom_forward.1} parent=1 // pred_check
      _
    $region95: #{protocom_forward.1} parent=1 // pred_check_branch
      %169 = sbr.rel (0) target = $region97
    $region96: #{protocom_forward.1} parent=1 // pred_region
      %170 = dma.done [#allocation14], 4096
    $region97: #{protocom_forward.1} parent=1 // pred_fallthru
      _
    // Predicated region
    $region98: #{protocom_forward.1} parent=1 // pred_check
      _
    $region99: #{protocom_forward.1} parent=1 // pred_check_branch
      %172 = sbr.rel (0) target = $region101
    $region100: #{protocom_forward.1} parent=1 // pred_region
      %173 = dma.done [#allocation17], 64
    $region101: #{protocom_forward.1} parent=1 // pred_fallthru
      _
    // Predicated region
    $region102: #{protocom_forward.1} parent=1 // pred_check
      _
    $region103: #{protocom_forward.1} parent=1 // pred_check_branch
      %175 = sbr.rel (0) target = $region105
    $region104: #{protocom_forward.1} parent=1 // pred_region
      %176 = dma.done [#allocation17], 16
    $region105: #{protocom_forward.1} parent=1 // pred_fallthru
      _
    %v177 = vld [vmem:[%s1] sm:$0x3]
    %v178 = vld [vmem:[%s2] sm:$0xff]
    %v179 = vld [vmem:[%s2 + $0x8] sm:$0xff]
    %v180 = vld [vmem:[%s2 + $0x10] sm:$0xff]
    %v181 = vld [vmem:[%s2 + $0x18] sm:$0xff]
    %v182 = vld [vmem:[%s3] sm:$0xff]
    %v183 = vld [vmem:[%s3 + $0x8] sm:$0xff]
    %v184 = vld [vmem:[%s3 + $0x10] sm:$0xff]
    %v185 = vld [vmem:[%s3 + $0x18] sm:$0xff]
    %v186 = vld [vmem:[%s4] sm:$0x3]
    %v187 = vlaneseq
    %v188 = vshrl.u32 %v187, 7
    %v189 = vadd.s32 %v188, 8
    %v190 = vadd.s32 %v188, 16
    %v191 = vadd.s32 %v188, 24
    %v192 = vand.u32 %v188, 15
    %v193 = vand.u32 %v189, 15
    %v194 = vand.u32 %v190, 15
    %v195 = vand.u32 %v191, 15
    %vm196 = vcmp.eq.s32.totalorder %v178, %v192
    %vm197 = vcmp.eq.s32.totalorder %v179, %v193
    %vm198 = vcmp.eq.s32.totalorder %v180, %v194
    %vm199 = vcmp.eq.s32.totalorder %v181, %v195
    %v200 = vsel %vm196, 1, 0
    %v201 = vsel %vm197, 1, 0
    %v202 = vsel %vm198, 1, 0
    %v203 = vsel %vm199, 1, 0
    %v204 = vcvt.s32.f32 %v200
    %v205 = vcvt.s32.f32 %v201
    %v206 = vcvt.s32.f32 %v202
    %v207 = vcvt.s32.f32 %v203
    %v208 = vlaneseq
    %v209 = vand.u32 %v208, 127
    %210 = vset.pattern.permute.xlu0 0
    %211 = vperm.xlu0 %210, %v178
    %v212 = vpop.permute.xlu0 %211
    %213 = vset.pattern.permute.xlu0 0
    %214 = vperm.xlu0 %213, %v179
    %v215 = vpop.permute.xlu0 %214
    %216 = vset.pattern.permute.xlu0 0
    %217 = vperm.xlu0 %216, %v180
    %v218 = vpop.permute.xlu0 %217
    %219 = vset.pattern.permute.xlu0 0
    %220 = vperm.xlu0 %219, %v181
    %v221 = vpop.permute.xlu0 %220
    %vm222 = vcmp.eq.s32.totalorder %v212, %v209
    %vm223 = vcmp.eq.s32.totalorder %v215, %v209
    %vm224 = vcmp.eq.s32.totalorder %v218, %v209
    %vm225 = vcmp.eq.s32.totalorder %v221, %v209
    %v226 = vsel %vm222, 1, 0
    %v227 = vsel %vm223, 1, 0
    %v228 = vsel %vm224, 1, 0
    %v229 = vsel %vm225, 1, 0
    %v230 = vcvt.s32.f32 %v226
    %v231 = vcvt.s32.f32 %v227
    %v232 = vcvt.s32.f32 %v228
    %v233 = vcvt.s32.f32 %v229
    %v234 = vld [vmem:[%s6] sm:$0xff]
    %v235 = vld [vmem:[%s6 + $0x8] sm:$0xff]
    %v236 = vmul.f32 %v234, %v230
    %v237 = vmul.f32 %v235, %v231
    %v238 = vmul.f32 %v234, %v232
    %v239 = vmul.f32 %v235, %v233
    %vm240 = vcmask 130048
    %v241 = vsel %vm240, %v236, 0.0
    %242 = vadd.xlane.f32.xlu0 %v241
    %v243 = vpop.xlane.xlu0 %242
    %v244 = vsel %vm240, %v237, 0.0
    %245 = vadd.xlane.f32.xlu0 %v244
    %v246 = vpop.xlane.xlu0 %245
    %v247 = vsel %vm240, %v238, 0.0
    %248 = vadd.xlane.f32.xlu0 %v247
    %v249 = vpop.xlane.xlu0 %248
    %v250 = vsel %vm240, %v239, 0.0
    %251 = vadd.xlane.f32.xlu0 %v250
    %v252 = vpop.xlane.xlu0 %251
    %s253 = smul.u32 0, 2
    %s254 = sld [smem:[#allocation3 + %s253]]
    %s255 = smul.u32 %s254, 6
    %s256 = smul.addr %s255, 8
    %s257 = scalar_lea.vmem %s5, %s256
    %v258 = vld [vmem:[%s257] sm:$0xff]
    %v259 = vld [vmem:[%s257 + $0x8] sm:$0xff]
    %v260 = vld [vmem:[%s257 + $0x10] sm:$0xff]
    %v261 = vld [vmem:[%s257 + $0x18] sm:$0xff]
    %v262 = vld [vmem:[%s257 + $0x20] sm:$0xff]
    %v263 = vld [vmem:[%s257 + $0x28] sm:$0xff]
    %s264 = sadd.s32 %s253, 1
    %s265 = sld [smem:[#allocation3 + %s264]]
    %s266 = smul.u32 %s265, 6
    %s267 = smul.addr %s266, 8
    %s268 = scalar_lea.vmem %s5, %s267
    %v269 = vld [vmem:[%s268] sm:$0xff]
    %v270 = vld [vmem:[%s268 + $0x8] sm:$0xff]
    %v271 = vld [vmem:[%s268 + $0x10] sm:$0xff]
    %v272 = vld [vmem:[%s268 + $0x18] sm:$0xff]
    %v273 = vld [vmem:[%s268 + $0x20] sm:$0xff]
    %v274 = vld [vmem:[%s268 + $0x28] sm:$0xff]
    %v275 = vld [vmem:[#allocation7] sm:$0xff]
    %v276 = vld [vmem:[#allocation7 + $0x8] sm:$0xff]
    %v277 = vld [vmem:[#allocation7 + $0x10] sm:$0xff]
    %v278 = vld [vmem:[#allocation7 + $0x18] sm:$0xff]
    %v279 = vld [vmem:[#allocation7 + $0x20] sm:$0xff]
    %v280 = vld [vmem:[#allocation7 + $0x28] sm:$0xff]
    %v281 = vld [vmem:[#allocation7 + $0x30] sm:$0xff]
    %v282 = vld [vmem:[#allocation7 + $0x38] sm:$0xff]
    %v283 = vld [vmem:[#allocation7 + $0x40] sm:$0xff]
    %v284 = vld [vmem:[#allocation7 + $0x48] sm:$0xff]
    %v285 = vld [vmem:[#allocation7 + $0x50] sm:$0xff]
    %v286 = vld [vmem:[#allocation7 + $0x58] sm:$0xff]
    %v287 = vld [vmem:[#allocation7 + $0x60] sm:$0xff]
    %v288 = vld [vmem:[#allocation7 + $0x68] sm:$0xff]
    %v289 = vld [vmem:[#allocation7 + $0x70] sm:$0xff]
    %v290 = vld [vmem:[#allocation7 + $0x78] sm:$0xff]
    %v291 = vld [vmem:[#allocation7 + $0x80] sm:$0xff]
    %v292 = vld [vmem:[#allocation7 + $0x88] sm:$0xff]
    %v293 = vld [vmem:[#allocation7 + $0x90] sm:$0xff]
    %v294 = vld [vmem:[#allocation7 + $0x98] sm:$0xff]
    %v295 = vld [vmem:[#allocation7 + $0xa0] sm:$0xff]
    %v296 = vld [vmem:[#allocation7 + $0xa8] sm:$0xff]
    %v297 = vld [vmem:[#allocation7 + $0xb0] sm:$0xff]
    %v298 = vld [vmem:[#allocation7 + $0xb8] sm:$0xff]
    %vm299 = vcmask 523264
    %v301 = vsel %vm299, %v177, 0
    %303 = vmatprep.subr.mxu0 0.0
    %304 = vmatpush1.msra.mxu0 0.0
    %305 = vmatprep.subr.mxu0 0.0
    %306 = vmatpush1.msra.mxu0 0.0
    %307 = vmatprep.subr.mxu0 0.0
    %308 = vmatpush1.msra.mxu0 0.0
    %309 = vmatprep.subr.mxu0 0.0
    %310 = vmatpush1.msra.mxu0 0.0
    %311 = vmatprep.subr.mxu0 0.0
    %312 = vmatpush1.msra.mxu0 0.0
    %313 = vmatprep.subr.mxu0 0.0
    %314 = vmatpush1.msra.mxu0 0.0
    %315 = vmatprep.subr.mxu0 0.0
    %316 = vmatpush1.msra.mxu0 0.0
    %317 = vmatprep.subr.mxu0 0.0
    %318 = vmatpush1.msra.mxu0 0.0
    %319 = vmatprep.subr.mxu0 %v297
    %320 = vmatpush1.msra.mxu0 %v296
    %321 = vmatprep.subr.mxu0 %v294
    %322 = vmatpush1.msra.mxu0 %v293
    %323 = vmatprep.subr.mxu0 %v291
    %324 = vmatpush1.msra.mxu0 %v290
    %325 = vmatprep.subr.mxu0 %v288
    %326 = vmatpush1.msra.mxu0 %v287
    %327 = vmatprep.subr.mxu0 %v285
    %328 = vmatpush1.msra.mxu0 %v284
    %329 = vmatprep.subr.mxu0 %v282
    %330 = vmatpush1.msra.mxu0 %v281
    %331 = vmatprep.subr.mxu0 %v279
    %332 = vmatpush1.msra.mxu0 %v278
    %333 = vmatprep.subr.mxu0 %v276
    %334 = vmatpush1.msra.mxu0 %v275
    %335 = vmatprep.subr.mxu0 0.0
    %336 = vmatpush2.msra.mxu0 0.0
    %337 = vmatprep.subr.mxu0 0.0
    %338 = vmatpush2.msra.mxu0 0.0
    %339 = vmatprep.subr.mxu0 0.0
    %340 = vmatpush2.msra.mxu0 0.0
    %341 = vmatprep.subr.mxu0 0.0
    %342 = vmatpush2.msra.mxu0 0.0
    %343 = vmatprep.subr.mxu0 0.0
    %344 = vmatpush2.msra.mxu0 0.0
    %345 = vmatprep.subr.mxu0 0.0
    %346 = vmatpush2.msra.mxu0 0.0
    %347 = vmatprep.subr.mxu0 0.0
    %348 = vmatpush2.msra.mxu0 0.0
    %349 = vmatprep.subr.mxu0 0.0
    %350 = vmatpush2.msra.mxu0 0.0
    %351 = vmatprep.subr.mxu0 0.0
    %352 = vmatpush2.msra.mxu0 0.0
    %353 = vmatprep.subr.mxu0 0.0
    %354 = vmatpush2.msra.mxu0 0.0
    %355 = vmatprep.subr.mxu0 0.0
    %356 = vmatpush2.msra.mxu0 0.0
    %357 = vmatprep.subr.mxu0 0.0
    %358 = vmatpush2.msra.mxu0 0.0
    %359 = vmatprep.subr.mxu0 0.0
    %360 = vmatpush2.msra.mxu0 0.0
    %361 = vmatprep.subr.mxu0 0.0
    %362 = vmatpush2.msra.mxu0 0.0
    %363 = vmatprep.subr.mxu0 0.0
    %364 = vmatpush2.msra.mxu0 0.0
    %365 = vmatprep.subr.mxu0 0.0
    %366 = vmatpush2.msra.mxu0 0.0
    %367 = vmatprep.mubr.f32.mxu0 0.0
    %368 = vmatmul.mubr.f32.gmra.mxu0 %v301
    %v369 = vpop.f32.mrf.mxu0
    %v370 = vadd.f32 0.0, %v369
    %v371 = vpop.f32.mrf.mxu0
    %v372 = vadd.f32 0.0, %v371
    %373 = vdwg.mxu0
    %374 = vmatprep.subr.mxu0 0.0
    %375 = vmatpush1.msra.mxu0 0.0
    %376 = vmatprep.subr.mxu0 0.0
    %377 = vmatpush1.msra.mxu0 0.0
    %378 = vmatprep.subr.mxu0 0.0
    %379 = vmatpush1.msra.mxu0 0.0
    %380 = vmatprep.subr.mxu0 0.0
    %381 = vmatpush1.msra.mxu0 0.0
    %382 = vmatprep.subr.mxu0 0.0
    %383 = vmatpush1.msra.mxu0 0.0
    %384 = vmatprep.subr.mxu0 0.0
    %385 = vmatpush1.msra.mxu0 0.0
    %386 = vmatprep.subr.mxu0 0.0
    %387 = vmatpush1.msra.mxu0 0.0
    %388 = vmatprep.subr.mxu0 0.0
    %389 = vmatpush1.msra.mxu0 0.0
    %390 = vmatprep.subr.mxu0 0.0
    %391 = vmatpush1.msra.mxu0 %v298
    %392 = vmatprep.subr.mxu0 0.0
    %393 = vmatpush1.msra.mxu0 %v295
    %394 = vmatprep.subr.mxu0 0.0
    %395 = vmatpush1.msra.mxu0 %v292
    %396 = vmatprep.subr.mxu0 0.0
    %397 = vmatpush1.msra.mxu0 %v289
    %398 = vmatprep.subr.mxu0 0.0
    %399 = vmatpush1.msra.mxu0 %v286
    %400 = vmatprep.subr.mxu0 0.0
    %401 = vmatpush1.msra.mxu0 %v283
    %402 = vmatprep.subr.mxu0 0.0
    %403 = vmatpush1.msra.mxu0 %v280
    %404 = vmatprep.subr.mxu0 0.0
    %405 = vmatpush1.msra.mxu0 %v277
    %406 = vmatprep.subr.mxu0 0.0
    %407 = vmatpush2.msra.mxu0 0.0
    %408 = vmatprep.subr.mxu0 0.0
    %409 = vmatpush2.msra.mxu0 0.0
    %410 = vmatprep.subr.mxu0 0.0
    %411 = vmatpush2.msra.mxu0 0.0
    %412 = vmatprep.subr.mxu0 0.0
    %413 = vmatpush2.msra.mxu0 0.0
    %414 = vmatprep.subr.mxu0 0.0
    %415 = vmatpush2.msra.mxu0 0.0
    %416 = vmatprep.subr.mxu0 0.0
    %417 = vmatpush2.msra.mxu0 0.0
    %418 = vmatprep.subr.mxu0 0.0
    %419 = vmatpush2.msra.mxu0 0.0
    %420 = vmatprep.subr.mxu0 0.0
    %421 = vmatpush2.msra.mxu0 0.0
    %422 = vmatprep.subr.mxu0 0.0
    %423 = vmatpush2.msra.mxu0 0.0
    %424 = vmatprep.subr.mxu0 0.0
    %425 = vmatpush2.msra.mxu0 0.0
    %426 = vmatprep.subr.mxu0 0.0
    %427 = vmatpush2.msra.mxu0 0.0
    %428 = vmatprep.subr.mxu0 0.0
    %429 = vmatpush2.msra.mxu0 0.0
    %430 = vmatprep.subr.mxu0 0.0
    %431 = vmatpush2.msra.mxu0 0.0
    %432 = vmatprep.subr.mxu0 0.0
    %433 = vmatpush2.msra.mxu0 0.0
    %434 = vmatprep.subr.mxu0 0.0
    %435 = vmatpush2.msra.mxu0 0.0
    %436 = vmatprep.subr.mxu0 0.0
    %437 = vmatpush2.msra.mxu0 0.0
    %438 = vmatprep.mubr.f32.mxu0 0.0
    %439 = vmatmul.mubr.f32.gmra.mxu0 %v301
    %v440 = vpop.f32.mrf.mxu0
    %v441 = vadd.f32 0.0, %v440
    %v442 = vpop.f32.mrf.mxu0
    %443 = vdwg.mxu0
    %vm444 = vcmask 15360
    %v446 = vsel %vm444, %v182, 0
    %v449 = vsel %vm444, %v183, 0
    %v452 = vsel %vm444, %v184, 0
    %v455 = vsel %vm444, %v185, 0
    %vm457 = vcmask 1041408
    %v459 = vsel %vm457, %v370, 0
    %v462 = vsel %vm457, %v372, 0
    %v465 = vsel %vm457, %v441, 0
    %467 = vmatprep.subr.mxu0 0.0
    %468 = vmatpush1.msra.mxu0 0.0
    %469 = vmatprep.subr.mxu0 0.0
    %470 = vmatpush1.msra.mxu0 0.0
    %471 = vmatprep.subr.mxu0 0.0
    %472 = vmatpush1.msra.mxu0 0.0
    %473 = vmatprep.subr.mxu0 0.0
    %474 = vmatpush1.msra.mxu0 0.0
    %475 = vmatprep.subr.mxu0 0.0
    %476 = vmatpush1.msra.mxu0 0.0
    %477 = vmatprep.subr.mxu0 0.0
    %478 = vmatpush1.msra.mxu0 0.0
    %479 = vmatprep.subr.mxu0 0.0
    %480 = vmatpush1.msra.mxu0 0.0
    %481 = vmatprep.subr.mxu0 0.0
    %482 = vmatpush1.msra.mxu0 0.0
    %483 = vmatprep.subr.mxu0 0.0
    %484 = vmatpush1.msra.mxu0 0.0
    %485 = vmatprep.subr.mxu0 0.0
    %486 = vmatpush1.msra.mxu0 0.0
    %487 = vmatprep.subr.mxu0 0.0
    %488 = vmatpush1.msra.mxu0 0.0
    %489 = vmatprep.subr.mxu0 0.0
    %490 = vmatpush1.msra.mxu0 0.0
    %491 = vmatprep.subr.mxu0 0.0
    %492 = vmatpush1.msra.mxu0 0.0
    %493 = vmatprep.subr.mxu0 0.0
    %494 = vmatpush1.msra.mxu0 0.0
    %495 = vmatprep.subr.mxu0 0.0
    %496 = vmatpush1.msra.mxu0 0.0
    %497 = vmatprep.subr.mxu0 %v462
    %498 = vmatpush1.msra.mxu0 %v459
    %499 = vmatprep.subr.mxu0 0.0
    %500 = vmatpush2.msra.mxu0 0.0
    %501 = vmatprep.subr.mxu0 0.0
    %502 = vmatpush2.msra.mxu0 0.0
    %503 = vmatprep.subr.mxu0 0.0
    %504 = vmatpush2.msra.mxu0 0.0
    %505 = vmatprep.subr.mxu0 0.0
    %506 = vmatpush2.msra.mxu0 0.0
    %507 = vmatprep.subr.mxu0 0.0
    %508 = vmatpush2.msra.mxu0 0.0
    %509 = vmatprep.subr.mxu0 0.0
    %510 = vmatpush2.msra.mxu0 0.0
    %511 = vmatprep.subr.mxu0 0.0
    %512 = vmatpush2.msra.mxu0 0.0
    %513 = vmatprep.subr.mxu0 0.0
    %514 = vmatpush2.msra.mxu0 0.0
    %515 = vmatprep.subr.mxu0 0.0
    %516 = vmatpush2.msra.mxu0 0.0
    %517 = vmatprep.subr.mxu0 0.0
    %518 = vmatpush2.msra.mxu0 0.0
    %519 = vmatprep.subr.mxu0 0.0
    %520 = vmatpush2.msra.mxu0 0.0
    %521 = vmatprep.subr.mxu0 0.0
    %522 = vmatpush2.msra.mxu0 0.0
    %523 = vmatprep.subr.mxu0 0.0
    %524 = vmatpush2.msra.mxu0 0.0
    %525 = vmatprep.subr.mxu0 0.0
    %526 = vmatpush2.msra.mxu0 0.0
    %527 = vmatprep.subr.mxu0 0.0
    %528 = vmatpush2.msra.mxu0 0.0
    %529 = vmatprep.subr.mxu0 0.0
    %530 = vmatpush2.msra.mxu0 0.0
    %531 = vmatprep.mubr.f32.mxu0 0.0
    %532 = vmatmul.mubr.f32.gmra.mxu0 %v446
    %v533 = vpop.f32.mrf.mxu0
    %v534 = vadd.f32 0.0, %v533
    %v535 = vpop.f32.mrf.mxu0
    %v536 = vadd.f32 0.0, %v535
    %537 = vmatprep.mubr.f32.mxu0 0.0
    %538 = vmatmul.mubr.f32.gmra.mxu0 %v449
    %v539 = vpop.f32.mrf.mxu0
    %v540 = vadd.f32 0.0, %v539
    %v541 = vpop.f32.mrf.mxu0
    %v542 = vadd.f32 0.0, %v541
    %543 = vmatprep.mubr.f32.mxu0 0.0
    %544 = vmatmul.mubr.f32.gmra.mxu0 %v452
    %v545 = vpop.f32.mrf.mxu0
    %v546 = vadd.f32 0.0, %v545
    %v547 = vpop.f32.mrf.mxu0
    %v548 = vadd.f32 0.0, %v547
    %549 = vmatprep.mubr.f32.mxu0 0.0
    %550 = vmatmul.mubr.f32.gmra.mxu0 %v455
    %v551 = vpop.f32.mrf.mxu0
    %v552 = vadd.f32 0.0, %v551
    %v553 = vpop.f32.mrf.mxu0
    %v554 = vadd.f32 0.0, %v553
    %555 = vdwg.mxu0
    %556 = vmatprep.subr.mxu0 0.0
    %557 = vmatpush1.msra.mxu0 0.0
    %558 = vmatprep.subr.mxu0 0.0
    %559 = vmatpush1.msra.mxu0 0.0
    %560 = vmatprep.subr.mxu0 0.0
    %561 = vmatpush1.msra.mxu0 0.0
    %562 = vmatprep.subr.mxu0 0.0
    %563 = vmatpush1.msra.mxu0 0.0
    %564 = vmatprep.subr.mxu0 0.0
    %565 = vmatpush1.msra.mxu0 0.0
    %566 = vmatprep.subr.mxu0 0.0
    %567 = vmatpush1.msra.mxu0 0.0
    %568 = vmatprep.subr.mxu0 0.0
    %569 = vmatpush1.msra.mxu0 0.0
    %570 = vmatprep.subr.mxu0 0.0
    %571 = vmatpush1.msra.mxu0 0.0
    %572 = vmatprep.subr.mxu0 0.0
    %573 = vmatpush1.msra.mxu0 0.0
    %574 = vmatprep.subr.mxu0 0.0
    %575 = vmatpush1.msra.mxu0 0.0
    %576 = vmatprep.subr.mxu0 0.0
    %577 = vmatpush1.msra.mxu0 0.0
    %578 = vmatprep.subr.mxu0 0.0
    %579 = vmatpush1.msra.mxu0 0.0
    %580 = vmatprep.subr.mxu0 0.0
    %581 = vmatpush1.msra.mxu0 0.0
    %582 = vmatprep.subr.mxu0 0.0
    %583 = vmatpush1.msra.mxu0 0.0
    %584 = vmatprep.subr.mxu0 0.0
    %585 = vmatpush1.msra.mxu0 0.0
    %586 = vmatprep.subr.mxu0 0.0
    %587 = vmatpush1.msra.mxu0 %v465
    %588 = vmatprep.subr.mxu0 0.0
    %589 = vmatpush2.msra.mxu0 0.0
    %590 = vmatprep.subr.mxu0 0.0
    %591 = vmatpush2.msra.mxu0 0.0
    %592 = vmatprep.subr.mxu0 0.0
    %593 = vmatpush2.msra.mxu0 0.0
    %594 = vmatprep.subr.mxu0 0.0
    %595 = vmatpush2.msra.mxu0 0.0
    %596 = vmatprep.subr.mxu0 0.0
    %597 = vmatpush2.msra.mxu0 0.0
    %598 = vmatprep.subr.mxu0 0.0
    %599 = vmatpush2.msra.mxu0 0.0
    %600 = vmatprep.subr.mxu0 0.0
    %601 = vmatpush2.msra.mxu0 0.0
    %602 = vmatprep.subr.mxu0 0.0
    %603 = vmatpush2.msra.mxu0 0.0
    %604 = vmatprep.subr.mxu0 0.0
    %605 = vmatpush2.msra.mxu0 0.0
    %606 = vmatprep.subr.mxu0 0.0
    %607 = vmatpush2.msra.mxu0 0.0
    %608 = vmatprep.subr.mxu0 0.0
    %609 = vmatpush2.msra.mxu0 0.0
    %610 = vmatprep.subr.mxu0 0.0
    %611 = vmatpush2.msra.mxu0 0.0
    %612 = vmatprep.subr.mxu0 0.0
    %613 = vmatpush2.msra.mxu0 0.0
    %614 = vmatprep.subr.mxu0 0.0
    %615 = vmatpush2.msra.mxu0 0.0
    %616 = vmatprep.subr.mxu0 0.0
    %617 = vmatpush2.msra.mxu0 0.0
    %618 = vmatprep.subr.mxu0 0.0
    %619 = vmatpush2.msra.mxu0 0.0
    %620 = vmatprep.mubr.f32.mxu0 0.0
    %621 = vmatmul.mubr.f32.gmra.mxu0 %v446
    %v622 = vpop.f32.mrf.mxu0
    %v623 = vadd.f32 0.0, %v622
    %v624 = vpop.f32.mrf.mxu0
    %625 = vmatprep.mubr.f32.mxu0 0.0
    %626 = vmatmul.mubr.f32.gmra.mxu0 %v449
    %v627 = vpop.f32.mrf.mxu0
    %v628 = vadd.f32 0.0, %v627
    %v629 = vpop.f32.mrf.mxu0
    %630 = vmatprep.mubr.f32.mxu0 0.0
    %631 = vmatmul.mubr.f32.gmra.mxu0 %v452
    %v632 = vpop.f32.mrf.mxu0
    %v633 = vadd.f32 0.0, %v632
    %v634 = vpop.f32.mrf.mxu0
    %635 = vmatprep.mubr.f32.mxu0 0.0
    %636 = vmatmul.mubr.f32.gmra.mxu0 %v455
    %v637 = vpop.f32.mrf.mxu0
    %v638 = vadd.f32 0.0, %v637
    %v639 = vpop.f32.mrf.mxu0
    %640 = vdwg.mxu0
    %v641 = vadd.f32 %v258, %v534
    %v642 = vadd.f32 %v259, %v536
    %v643 = vadd.f32 %v260, %v623
    %v644 = vadd.f32 %v261, %v540
    %v645 = vadd.f32 %v262, %v542
    %v646 = vadd.f32 %v263, %v628
    %v647 = vadd.f32 %v269, %v546
    %v648 = vadd.f32 %v270, %v548
    %v649 = vadd.f32 %v271, %v633
    %v650 = vadd.f32 %v272, %v552
    %v651 = vadd.f32 %v273, %v554
    %v652 = vadd.f32 %v274, %v638
    %v653 = vld [vmem:[#allocation9] sm:$0x7]
    %v655 = vlaneseq
    %v656 = vshrl.u32 %v655, 7
    %v657 = vsub.s32 0, %v656
    %v658 = vrot.slane %v653, %v657
    %v659 = vlaneseq
    %v660 = vshrl.u32 %v659, 7
    %v661 = vsub.s32 1, %v660
    %v662 = vrot.slane %v653, %v661
    %v663 = vlaneseq
    %v664 = vshrl.u32 %v663, 7
    %v665 = vsub.s32 2, %v664
    %v666 = vrot.slane %v653, %v665
    %v670 = vadd.f32 %v641, %v658
    %v671 = vadd.f32 %v642, %v662
    %v672 = vadd.f32 %v643, %v666
    %v673 = vadd.f32 %v644, %v658
    %v674 = vadd.f32 %v645, %v662
    %v675 = vadd.f32 %v646, %v666
    %v676 = vadd.f32 %v647, %v658
    %v677 = vadd.f32 %v648, %v662
    %v678 = vadd.f32 %v649, %v666
    %v679 = vadd.f32 %v650, %v658
    %v680 = vadd.f32 %v651, %v662
    %v681 = vadd.f32 %v652, %v666
    %v682 = vmax.f32 %v670, 0.0
    %v683 = vmax.f32 %v671, 0.0
    %v684 = vmax.f32 %v672, 0.0
    %v685 = vmax.f32 %v673, 0.0
    %v686 = vmax.f32 %v674, 0.0
    %v687 = vmax.f32 %v675, 0.0
    %v688 = vmax.f32 %v676, 0.0
    %v689 = vmax.f32 %v677, 0.0
    %v690 = vmax.f32 %v678, 0.0
    %v691 = vmax.f32 %v679, 0.0
    %v692 = vmax.f32 %v680, 0.0
    %v693 = vmax.f32 %v681, 0.0
    %v694 = vld [vmem:[#allocation10] sm:$0x7]
    %v696 = vlaneseq
    %v697 = vshrl.u32 %v696, 7
    %v698 = vsub.s32 0, %v697
    %v699 = vrot.slane %v694, %v698
    %v700 = vlaneseq
    %v701 = vshrl.u32 %v700, 7
    %v702 = vsub.s32 1, %v701
    %v703 = vrot.slane %v694, %v702
    %v704 = vlaneseq
    %v705 = vshrl.u32 %v704, 7
    %v706 = vsub.s32 2, %v705
    %v707 = vrot.slane %v694, %v706
    %v711 = vmul.f32 %v682, %v699
    %v712 = vmul.f32 %v683, %v703
    %v713 = vmul.f32 %v684, %v707
    %v714 = vmul.f32 %v685, %v699
    %v715 = vmul.f32 %v686, %v703
    %v716 = vmul.f32 %v687, %v707
    %v717 = vmul.f32 %v688, %v699
    %v718 = vmul.f32 %v689, %v703
    %v719 = vmul.f32 %v690, %v707
    %v720 = vmul.f32 %v691, %v699
    %v721 = vmul.f32 %v692, %v703
    %v722 = vmul.f32 %v693, %v707
    %v723 = vadd.f32 %v711, %v712
    %v724 = vadd.f32 %v723, %v713
    %725 = vadd.xlane.f32.xlu0 %v724
    %v726 = vpop.xlane.xlu0 %725
    %v727 = vadd.f32 %v714, %v715
    %v728 = vadd.f32 %v727, %v716
    %729 = vadd.xlane.f32.xlu0 %v728
    %v730 = vpop.xlane.xlu0 %729
    %v731 = vadd.f32 %v717, %v718
    %v732 = vadd.f32 %v731, %v719
    %733 = vadd.xlane.f32.xlu0 %v732
    %v734 = vpop.xlane.xlu0 %733
    %v735 = vadd.f32 %v720, %v721
    %v736 = vadd.f32 %v735, %v722
    %737 = vadd.xlane.f32.xlu0 %v736
    %v738 = vpop.xlane.xlu0 %737
    %v739 = vld [vmem:[#allocation4] sm:$0x1]
    %v741 = vlaneseq
    %v742 = vshrl.u32 %v741, 7
    %v743 = vsub.s32 0, %v742
    %v744 = vrot.slane %v739, %v743
    %v746 = vadd.f32 %v726, %v744
    %v747 = vadd.f32 %v730, %v744
    %v748 = vadd.f32 %v734, %v744
    %v749 = vadd.f32 %v738, %v744
    %v750 = vmul.f32 %v243, %v746
    %v751 = vmul.f32 %v246, %v747
    %v752 = vmul.f32 %v249, %v748
    %v753 = vmul.f32 %v252, %v749
    %v754 = vsub.f32 1.0, %v204
    %v755 = vsub.f32 1.0, %v205
    %v756 = vsub.f32 1.0, %v206
    %v757 = vsub.f32 1.0, %v207
    %v758 = vmul.f32 %v750, %v754
    %v759 = vmul.f32 %v751, %v755
    %v760 = vmul.f32 %v752, %v756
    %v761 = vmul.f32 %v753, %v757
    %v762 = vadd.f32 %v758, %v204
    %v763 = vadd.f32 %v759, %v205
    %v764 = vadd.f32 %v760, %v206
    %v765 = vadd.f32 %v761, %v207
    %v766 = vld [vmem:[#allocation12] sm:$0xff]
    %v767 = vld [vmem:[#allocation12 + $0x8] sm:$0xff]
    %v768 = vld [vmem:[#allocation12 + $0x10] sm:$0xff]
    %v769 = vld [vmem:[#allocation12 + $0x18] sm:$0xff]
    %v770 = vld [vmem:[#allocation12 + $0x20] sm:$0xff]
    %v771 = vld [vmem:[#allocation12 + $0x28] sm:$0xff]
    %v772 = vld [vmem:[#allocation12 + $0x30] sm:$0xff]
    %v773 = vld [vmem:[#allocation12 + $0x38] sm:$0xff]
    %774 = vmatprep.subr.mxu0 0.0
    %775 = vmatpush1.msra.mxu0 0.0
    %776 = vmatprep.subr.mxu0 0.0
    %777 = vmatpush1.msra.mxu0 0.0
    %778 = vmatprep.subr.mxu0 0.0
    %779 = vmatpush1.msra.mxu0 0.0
    %780 = vmatprep.subr.mxu0 0.0
    %781 = vmatpush1.msra.mxu0 0.0
    %782 = vmatprep.subr.mxu0 0.0
    %783 = vmatpush1.msra.mxu0 0.0
    %784 = vmatprep.subr.mxu0 0.0
    %785 = vmatpush1.msra.mxu0 0.0
    %786 = vmatprep.subr.mxu0 0.0
    %787 = vmatpush1.msra.mxu0 0.0
    %788 = vmatprep.subr.mxu0 0.0
    %789 = vmatpush1.msra.mxu0 0.0
    %790 = vmatprep.subr.mxu0 0.0
    %791 = vmatpush1.msra.mxu0 %v773
    %792 = vmatprep.subr.mxu0 0.0
    %793 = vmatpush1.msra.mxu0 %v772
    %794 = vmatprep.subr.mxu0 0.0
    %795 = vmatpush1.msra.mxu0 %v771
    %796 = vmatprep.subr.mxu0 0.0
    %797 = vmatpush1.msra.mxu0 %v770
    %798 = vmatprep.subr.mxu0 0.0
    %799 = vmatpush1.msra.mxu0 %v769
    %800 = vmatprep.subr.mxu0 0.0
    %801 = vmatpush1.msra.mxu0 %v768
    %802 = vmatprep.subr.mxu0 0.0
    %803 = vmatpush1.msra.mxu0 %v767
    %804 = vmatprep.subr.mxu0 0.0
    %805 = vmatpush1.msra.mxu0 %v766
    %806 = vmatprep.subr.mxu0 0.0
    %807 = vmatpush2.msra.mxu0 0.0
    %808 = vmatprep.subr.mxu0 0.0
    %809 = vmatpush2.msra.mxu0 0.0
    %810 = vmatprep.subr.mxu0 0.0
    %811 = vmatpush2.msra.mxu0 0.0
    %812 = vmatprep.subr.mxu0 0.0
    %813 = vmatpush2.msra.mxu0 0.0
    %814 = vmatprep.subr.mxu0 0.0
    %815 = vmatpush2.msra.mxu0 0.0
    %816 = vmatprep.subr.mxu0 0.0
    %817 = vmatpush2.msra.mxu0 0.0
    %818 = vmatprep.subr.mxu0 0.0
    %819 = vmatpush2.msra.mxu0 0.0
    %820 = vmatprep.subr.mxu0 0.0
    %821 = vmatpush2.msra.mxu0 0.0
    %822 = vmatprep.subr.mxu0 0.0
    %823 = vmatpush2.msra.mxu0 0.0
    %824 = vmatprep.subr.mxu0 0.0
    %825 = vmatpush2.msra.mxu0 0.0
    %826 = vmatprep.subr.mxu0 0.0
    %827 = vmatpush2.msra.mxu0 0.0
    %828 = vmatprep.subr.mxu0 0.0
    %829 = vmatpush2.msra.mxu0 0.0
    %830 = vmatprep.subr.mxu0 0.0
    %831 = vmatpush2.msra.mxu0 0.0
    %832 = vmatprep.subr.mxu0 0.0
    %833 = vmatpush2.msra.mxu0 0.0
    %834 = vmatprep.subr.mxu0 0.0
    %835 = vmatpush2.msra.mxu0 0.0
    %836 = vmatprep.subr.mxu0 0.0
    %837 = vmatpush2.msra.mxu0 0.0
    %838 = vmatprep.mubr.f32.mxu0 0.0
    %839 = vmatmul.mubr.f32.gmra.mxu0 %v301
    %v840 = vpop.f32.mrf.mxu0
    %v841 = vadd.f32 0.0, %v840
    %v842 = vpop.f32.mrf.mxu0
    %843 = vdwg.mxu0
    %v845 = vsel %vm457, %v841, 0
    %847 = vmatprep.subr.mxu0 0.0
    %848 = vmatpush1.msra.mxu0 0.0
    %849 = vmatprep.subr.mxu0 0.0
    %850 = vmatpush1.msra.mxu0 0.0
    %851 = vmatprep.subr.mxu0 0.0
    %852 = vmatpush1.msra.mxu0 0.0
    %853 = vmatprep.subr.mxu0 0.0
    %854 = vmatpush1.msra.mxu0 0.0
    %855 = vmatprep.subr.mxu0 0.0
    %856 = vmatpush1.msra.mxu0 0.0
    %857 = vmatprep.subr.mxu0 0.0
    %858 = vmatpush1.msra.mxu0 0.0
    %859 = vmatprep.subr.mxu0 0.0
    %860 = vmatpush1.msra.mxu0 0.0
    %861 = vmatprep.subr.mxu0 0.0
    %862 = vmatpush1.msra.mxu0 0.0
    %863 = vmatprep.subr.mxu0 0.0
    %864 = vmatpush1.msra.mxu0 0.0
    %865 = vmatprep.subr.mxu0 0.0
    %866 = vmatpush1.msra.mxu0 0.0
    %867 = vmatprep.subr.mxu0 0.0
    %868 = vmatpush1.msra.mxu0 0.0
    %869 = vmatprep.subr.mxu0 0.0
    %870 = vmatpush1.msra.mxu0 0.0
    %871 = vmatprep.subr.mxu0 0.0
    %872 = vmatpush1.msra.mxu0 0.0
    %873 = vmatprep.subr.mxu0 0.0
    %874 = vmatpush1.msra.mxu0 0.0
    %875 = vmatprep.subr.mxu0 0.0
    %876 = vmatpush1.msra.mxu0 0.0
    %877 = vmatprep.subr.mxu0 0.0
    %878 = vmatpush1.msra.mxu0 %v845
    %879 = vmatprep.subr.mxu0 0.0
    %880 = vmatpush2.msra.mxu0 0.0
    %881 = vmatprep.subr.mxu0 0.0
    %882 = vmatpush2.msra.mxu0 0.0
    %883 = vmatprep.subr.mxu0 0.0
    %884 = vmatpush2.msra.mxu0 0.0
    %885 = vmatprep.subr.mxu0 0.0
    %886 = vmatpush2.msra.mxu0 0.0
    %887 = vmatprep.subr.mxu0 0.0
    %888 = vmatpush2.msra.mxu0 0.0
    %889 = vmatprep.subr.mxu0 0.0
    %890 = vmatpush2.msra.mxu0 0.0
    %891 = vmatprep.subr.mxu0 0.0
    %892 = vmatpush2.msra.mxu0 0.0
    %893 = vmatprep.subr.mxu0 0.0
    %894 = vmatpush2.msra.mxu0 0.0
    %895 = vmatprep.subr.mxu0 0.0
    %896 = vmatpush2.msra.mxu0 0.0
    %897 = vmatprep.subr.mxu0 0.0
    %898 = vmatpush2.msra.mxu0 0.0
    %899 = vmatprep.subr.mxu0 0.0
    %900 = vmatpush2.msra.mxu0 0.0
    %901 = vmatprep.subr.mxu0 0.0
    %902 = vmatpush2.msra.mxu0 0.0
    %903 = vmatprep.subr.mxu0 0.0
    %904 = vmatpush2.msra.mxu0 0.0
    %905 = vmatprep.subr.mxu0 0.0
    %906 = vmatpush2.msra.mxu0 0.0
    %907 = vmatprep.subr.mxu0 0.0
    %908 = vmatpush2.msra.mxu0 0.0
    %909 = vmatprep.subr.mxu0 0.0
    %910 = vmatpush2.msra.mxu0 0.0
    %911 = vmatprep.mubr.f32.mxu0 0.0
    %912 = vmatmul.mubr.f32.gmra.mxu0 %v446
    %v913 = vpop.f32.mrf.mxu0
    %v914 = vadd.f32 0.0, %v913
    %v915 = vpop.f32.mrf.mxu0
    %916 = vmatprep.mubr.f32.mxu0 0.0
    %917 = vmatmul.mubr.f32.gmra.mxu0 %v449
    %v918 = vpop.f32.mrf.mxu0
    %v919 = vadd.f32 0.0, %v918
    %v920 = vpop.f32.mrf.mxu0
    %921 = vmatprep.mubr.f32.mxu0 0.0
    %922 = vmatmul.mubr.f32.gmra.mxu0 %v452
    %v923 = vpop.f32.mrf.mxu0
    %v924 = vadd.f32 0.0, %v923
    %v925 = vpop.f32.mrf.mxu0
    %926 = vmatprep.mubr.f32.mxu0 0.0
    %927 = vmatmul.mubr.f32.gmra.mxu0 %v455
    %v928 = vpop.f32.mrf.mxu0
    %v929 = vadd.f32 0.0, %v928
    %v930 = vpop.f32.mrf.mxu0
    %931 = vdwg.mxu0
    %v932 = vld [vmem:[#allocation5] sm:$0xff]
    %v933 = vld [vmem:[#allocation5 + $0x8] sm:$0xff]
    %934 = vset.pattern.permute.xlu0 0
    %935 = vperm.xlu0 %934, %v200
    %v936 = vpop.permute.xlu0 %935
    %937 = vset.pattern.permute.xlu0 0
    %938 = vperm.xlu0 %937, %v201
    %v939 = vpop.permute.xlu0 %938
    %940 = vset.pattern.permute.xlu0 0
    %941 = vperm.xlu0 %940, %v202
    %v942 = vpop.permute.xlu0 %941
    %943 = vset.pattern.permute.xlu0 0
    %944 = vperm.xlu0 %943, %v203
    %v945 = vpop.permute.xlu0 %944
    %vm946 = vcmp.eq.s32.totalorder %v936, 1
    %vm947 = vcmp.eq.s32.totalorder %v939, 1
    %vm948 = vcmp.eq.s32.totalorder %v942, 1
    %vm949 = vcmp.eq.s32.totalorder %v945, 1
    %v950 = vsel %vm946, %v914, %v932
    %v951 = vsel %vm947, %v919, %v933
    %v952 = vsel %vm948, %v924, %v932
    %v953 = vsel %vm949, %v929, %v933
    %v954 = vld [vmem:[#allocation13] sm:$0x1]
    %v956 = vlaneseq
    %v957 = vshrl.u32 %v956, 7
    %v958 = vsub.s32 0, %v957
    %v959 = vrot.slane %v954, %v958
    %v961 = vadd.f32 %v950, %v959
    %v962 = vadd.f32 %v951, %v959
    %v963 = vadd.f32 %v952, %v959
    %v964 = vadd.f32 %v953, %v959
    %v965 = vmax.f32 %v961, 0.0
    %v966 = vmax.f32 %v962, 0.0
    %v967 = vmax.f32 %v963, 0.0
    %v968 = vmax.f32 %v964, 0.0
    %970 = vset.pattern.permute.xlu0 0
    %971 = vperm.xlu0 %970, %v762
    %v972 = vpop.permute.xlu0 %971
    %975 = vset.pattern.permute.xlu0 0
    %976 = vperm.xlu0 %975, %v763
    %v977 = vpop.permute.xlu0 %976
    %980 = vset.pattern.permute.xlu0 0
    %981 = vperm.xlu0 %980, %v764
    %v982 = vpop.permute.xlu0 %981
    %985 = vset.pattern.permute.xlu0 0
    %986 = vperm.xlu0 %985, %v765
    %v987 = vpop.permute.xlu0 %986
    %v989 = vmul.f32 %v972, %v965
    %v990 = vmul.f32 %v977, %v966
    %v991 = vmul.f32 %v982, %v967
    %v992 = vmul.f32 %v987, %v968
    %vm993 = vcmask 261120
    %v995 = vsel %vm993, %v186, 0
    %997 = vmatprep.subr.mxu0 0.0
    %998 = vmatpush1.msra.mxu0 0.0
    %999 = vmatprep.subr.mxu0 0.0
    %1000 = vmatpush1.msra.mxu0 0.0
    %1001 = vmatprep.subr.mxu0 0.0
    %1002 = vmatpush1.msra.mxu0 0.0
    %1003 = vmatprep.subr.mxu0 0.0
    %1004 = vmatpush1.msra.mxu0 0.0
    %1005 = vmatprep.subr.mxu0 0.0
    %1006 = vmatpush1.msra.mxu0 0.0
    %1007 = vmatprep.subr.mxu0 0.0
    %1008 = vmatpush1.msra.mxu0 0.0
    %1009 = vmatprep.subr.mxu0 0.0
    %1010 = vmatpush1.msra.mxu0 0.0
    %1011 = vmatprep.subr.mxu0 0.0
    %1012 = vmatpush1.msra.mxu0 0.0
    %1013 = vmatprep.subr.mxu0 0.0
    %1014 = vmatpush1.msra.mxu0 0.0
    %1015 = vmatprep.subr.mxu0 0.0
    %1016 = vmatpush1.msra.mxu0 0.0
    %1017 = vmatprep.subr.mxu0 0.0
    %1018 = vmatpush1.msra.mxu0 0.0
    %1019 = vmatprep.subr.mxu0 0.0
    %1020 = vmatpush1.msra.mxu0 0.0
    %1021 = vmatprep.subr.mxu0 0.0
    %1022 = vmatpush1.msra.mxu0 %v992
    %1023 = vmatprep.subr.mxu0 0.0
    %1024 = vmatpush1.msra.mxu0 %v991
    %1025 = vmatprep.subr.mxu0 0.0
    %1026 = vmatpush1.msra.mxu0 %v990
    %1027 = vmatprep.subr.mxu0 0.0
    %1028 = vmatpush1.msra.mxu0 %v989
    %1029 = vmatprep.subr.mxu0 0.0
    %1030 = vmatpush2.msra.mxu0 0.0
    %1031 = vmatprep.subr.mxu0 0.0
    %1032 = vmatpush2.msra.mxu0 0.0
    %1033 = vmatprep.subr.mxu0 0.0
    %1034 = vmatpush2.msra.mxu0 0.0
    %1035 = vmatprep.subr.mxu0 0.0
    %1036 = vmatpush2.msra.mxu0 0.0
    %1037 = vmatprep.subr.mxu0 0.0
    %1038 = vmatpush2.msra.mxu0 0.0
    %1039 = vmatprep.subr.mxu0 0.0
    %1040 = vmatpush2.msra.mxu0 0.0
    %1041 = vmatprep.subr.mxu0 0.0
    %1042 = vmatpush2.msra.mxu0 0.0
    %1043 = vmatprep.subr.mxu0 0.0
    %1044 = vmatpush2.msra.mxu0 0.0
    %1045 = vmatprep.subr.mxu0 0.0
    %1046 = vmatpush2.msra.mxu0 0.0
    %1047 = vmatprep.subr.mxu0 0.0
    %1048 = vmatpush2.msra.mxu0 0.0
    %1049 = vmatprep.subr.mxu0 0.0
    %1050 = vmatpush2.msra.mxu0 0.0
    %1051 = vmatprep.subr.mxu0 0.0
    %1052 = vmatpush2.msra.mxu0 0.0
    %1053 = vmatprep.subr.mxu0 0.0
    %1054 = vmatpush2.msra.mxu0 0.0
    %1055 = vmatprep.subr.mxu0 0.0
    %1056 = vmatpush2.msra.mxu0 0.0
    %1057 = vmatprep.subr.mxu0 0.0
    %1058 = vmatpush2.msra.mxu0 0.0
    %1059 = vmatprep.subr.mxu0 0.0
    %1060 = vmatpush2.msra.mxu0 0.0
    %1061 = vmatprep.mubr.f32.mxu0 0.0
    %1062 = vmatmul.mubr.f32.gmra.mxu0 %v995
    %v1063 = vpop.f32.mrf.mxu0
    %v1064 = vadd.f32 0.0, %v1063
    %v1065 = vpop.f32.mrf.mxu0
    %1066 = vdwg.mxu0
    %v1067 = vld [vmem:[#allocation15] sm:$0xff]
    %v1068 = vld [vmem:[#allocation15 + $0x8] sm:$0xff]
    %v1069 = vld [vmem:[#allocation15 + $0x10] sm:$0xff]
    %v1070 = vld [vmem:[#allocation15 + $0x18] sm:$0xff]
    %v1071 = vld [vmem:[#allocation15 + $0x20] sm:$0xff]
    %v1072 = vld [vmem:[#allocation15 + $0x28] sm:$0xff]
    %v1073 = vld [vmem:[#allocation15 + $0x30] sm:$0xff]
    %v1074 = vld [vmem:[#allocation15 + $0x38] sm:$0xff]
    %v1075 = vld [vmem:[#allocation15 + $0x40] sm:$0xff]
    %v1076 = vld [vmem:[#allocation15 + $0x48] sm:$0xff]
    %v1077 = vld [vmem:[#allocation15 + $0x50] sm:$0xff]
    %v1078 = vld [vmem:[#allocation15 + $0x58] sm:$0xff]
    %v1079 = vld [vmem:[#allocation15 + $0x60] sm:$0xff]
    %v1080 = vld [vmem:[#allocation15 + $0x68] sm:$0xff]
    %v1081 = vld [vmem:[#allocation15 + $0x70] sm:$0xff]
    %v1082 = vld [vmem:[#allocation15 + $0x78] sm:$0xff]
    %v1083 = vld [vmem:[#allocation15 + $0x80] sm:$0xff]
    %v1084 = vld [vmem:[#allocation15 + $0x88] sm:$0xff]
    %v1085 = vld [vmem:[#allocation15 + $0x90] sm:$0xff]
    %v1086 = vld [vmem:[#allocation15 + $0x98] sm:$0xff]
    %v1087 = vld [vmem:[#allocation15 + $0xa0] sm:$0xff]
    %v1088 = vld [vmem:[#allocation15 + $0xa8] sm:$0xff]
    %v1089 = vld [vmem:[#allocation15 + $0xb0] sm:$0xff]
    %v1090 = vld [vmem:[#allocation15 + $0xb8] sm:$0xff]
    %v1091 = vld [vmem:[#allocation15 + $0xc0] sm:$0xff]
    %v1092 = vld [vmem:[#allocation15 + $0xc8] sm:$0xff]
    %v1093 = vld [vmem:[#allocation15 + $0xd0] sm:$0xff]
    %v1094 = vld [vmem:[#allocation15 + $0xd8] sm:$0xff]
    %v1095 = vld [vmem:[#allocation15 + $0xe0] sm:$0xff]
    %v1096 = vld [vmem:[#allocation15 + $0xe8] sm:$0xff]
    %v1097 = vld [vmem:[#allocation15 + $0xf0] sm:$0xff]
    %v1098 = vld [vmem:[#allocation15 + $0xf8] sm:$0xff]
    %v1099 = vld [vmem:[#allocation16] sm:$0xf]
    %v1101 = vlaneseq
    %v1102 = vshrl.u32 %v1101, 7
    %v1103 = vsub.s32 0, %v1102
    %v1104 = vrot.slane %v1099, %v1103
    %v1105 = vlaneseq
    %v1106 = vshrl.u32 %v1105, 7
    %v1107 = vsub.s32 1, %v1106
    %v1108 = vrot.slane %v1099, %v1107
    %v1109 = vlaneseq
    %v1110 = vshrl.u32 %v1109, 7
    %v1111 = vsub.s32 2, %v1110
    %v1112 = vrot.slane %v1099, %v1111
    %v1113 = vlaneseq
    %v1114 = vshrl.u32 %v1113, 7
    %v1115 = vsub.s32 3, %v1114
    %v1116 = vrot.slane %v1099, %v1115
    %v1122 = vsel %vm299, %v1064, 0
    %1124 = vmatprep.subr.mxu0 0.0
    %1125 = vmatpush1.msra.mxu0 0.0
    %1126 = vmatprep.subr.mxu0 0.0
    %1127 = vmatpush1.msra.mxu0 0.0
    %1128 = vmatprep.subr.mxu0 0.0
    %1129 = vmatpush1.msra.mxu0 0.0
    %1130 = vmatprep.subr.mxu0 0.0
    %1131 = vmatpush1.msra.mxu0 0.0
    %1132 = vmatprep.subr.mxu0 0.0
    %1133 = vmatpush1.msra.mxu0 0.0
    %1134 = vmatprep.subr.mxu0 0.0
    %1135 = vmatpush1.msra.mxu0 0.0
    %1136 = vmatprep.subr.mxu0 0.0
    %1137 = vmatpush1.msra.mxu0 0.0
    %1138 = vmatprep.subr.mxu0 0.0
    %1139 = vmatpush1.msra.mxu0 0.0
    %1140 = vmatprep.subr.mxu0 %v1096
    %1141 = vmatpush1.msra.mxu0 %v1095
    %1142 = vmatprep.subr.mxu0 %v1092
    %1143 = vmatpush1.msra.mxu0 %v1091
    %1144 = vmatprep.subr.mxu0 %v1088
    %1145 = vmatpush1.msra.mxu0 %v1087
    %1146 = vmatprep.subr.mxu0 %v1084
    %1147 = vmatpush1.msra.mxu0 %v1083
    %1148 = vmatprep.subr.mxu0 %v1080
    %1149 = vmatpush1.msra.mxu0 %v1079
    %1150 = vmatprep.subr.mxu0 %v1076
    %1151 = vmatpush1.msra.mxu0 %v1075
    %1152 = vmatprep.subr.mxu0 %v1072
    %1153 = vmatpush1.msra.mxu0 %v1071
    %1154 = vmatprep.subr.mxu0 %v1068
    %1155 = vmatpush1.msra.mxu0 %v1067
    %1156 = vmatprep.subr.mxu0 0.0
    %1157 = vmatpush2.msra.mxu0 0.0
    %1158 = vmatprep.subr.mxu0 0.0
    %1159 = vmatpush2.msra.mxu0 0.0
    %1160 = vmatprep.subr.mxu0 0.0
    %1161 = vmatpush2.msra.mxu0 0.0
    %1162 = vmatprep.subr.mxu0 0.0
    %1163 = vmatpush2.msra.mxu0 0.0
    %1164 = vmatprep.subr.mxu0 0.0
    %1165 = vmatpush2.msra.mxu0 0.0
    %1166 = vmatprep.subr.mxu0 0.0
    %1167 = vmatpush2.msra.mxu0 0.0
    %1168 = vmatprep.subr.mxu0 0.0
    %1169 = vmatpush2.msra.mxu0 0.0
    %1170 = vmatprep.subr.mxu0 0.0
    %1171 = vmatpush2.msra.mxu0 0.0
    %1172 = vmatprep.subr.mxu0 0.0
    %1173 = vmatpush2.msra.mxu0 0.0
    %1174 = vmatprep.subr.mxu0 0.0
    %1175 = vmatpush2.msra.mxu0 0.0
    %1176 = vmatprep.subr.mxu0 0.0
    %1177 = vmatpush2.msra.mxu0 0.0
    %1178 = vmatprep.subr.mxu0 0.0
    %1179 = vmatpush2.msra.mxu0 0.0
    %1180 = vmatprep.subr.mxu0 0.0
    %1181 = vmatpush2.msra.mxu0 0.0
    %1182 = vmatprep.subr.mxu0 0.0
    %1183 = vmatpush2.msra.mxu0 0.0
    %1184 = vmatprep.subr.mxu0 0.0
    %1185 = vmatpush2.msra.mxu0 0.0
    %1186 = vmatprep.subr.mxu0 0.0
    %1187 = vmatpush2.msra.mxu0 0.0
    %1188 = vmatprep.mubr.f32.mxu0 0.0
    %1189 = vmatmul.mubr.f32.gmra.mxu0 %v1122
    %v1190 = vpop.f32.mrf.mxu0
    %v1191 = vadd.f32 %v1104, %v1190
    %v1192 = vpop.f32.mrf.mxu0
    %v1193 = vadd.f32 %v1108, %v1192
    %1194 = vdwg.mxu0
    %1195 = vmatprep.subr.mxu0 0.0
    %1196 = vmatpush1.msra.mxu0 0.0
    %1197 = vmatprep.subr.mxu0 0.0
    %1198 = vmatpush1.msra.mxu0 0.0
    %1199 = vmatprep.subr.mxu0 0.0
    %1200 = vmatpush1.msra.mxu0 0.0
    %1201 = vmatprep.subr.mxu0 0.0
    %1202 = vmatpush1.msra.mxu0 0.0
    %1203 = vmatprep.subr.mxu0 0.0
    %1204 = vmatpush1.msra.mxu0 0.0
    %1205 = vmatprep.subr.mxu0 0.0
    %1206 = vmatpush1.msra.mxu0 0.0
    %1207 = vmatprep.subr.mxu0 0.0
    %1208 = vmatpush1.msra.mxu0 0.0
    %1209 = vmatprep.subr.mxu0 0.0
    %1210 = vmatpush1.msra.mxu0 0.0
    %1211 = vmatprep.subr.mxu0 %v1098
    %1212 = vmatpush1.msra.mxu0 %v1097
    %1213 = vmatprep.subr.mxu0 %v1094
    %1214 = vmatpush1.msra.mxu0 %v1093
    %1215 = vmatprep.subr.mxu0 %v1090
    %1216 = vmatpush1.msra.mxu0 %v1089
    %1217 = vmatprep.subr.mxu0 %v1086
    %1218 = vmatpush1.msra.mxu0 %v1085
    %1219 = vmatprep.subr.mxu0 %v1082
    %1220 = vmatpush1.msra.mxu0 %v1081
    %1221 = vmatprep.subr.mxu0 %v1078
    %1222 = vmatpush1.msra.mxu0 %v1077
    %1223 = vmatprep.subr.mxu0 %v1074
    %1224 = vmatpush1.msra.mxu0 %v1073
    %1225 = vmatprep.subr.mxu0 %v1070
    %1226 = vmatpush1.msra.mxu0 %v1069
    %1227 = vmatprep.subr.mxu0 0.0
    %1228 = vmatpush2.msra.mxu0 0.0
    %1229 = vmatprep.subr.mxu0 0.0
    %1230 = vmatpush2.msra.mxu0 0.0
    %1231 = vmatprep.subr.mxu0 0.0
    %1232 = vmatpush2.msra.mxu0 0.0
    %1233 = vmatprep.subr.mxu0 0.0
    %1234 = vmatpush2.msra.mxu0 0.0
    %1235 = vmatprep.subr.mxu0 0.0
    %1236 = vmatpush2.msra.mxu0 0.0
    %1237 = vmatprep.subr.mxu0 0.0
    %1238 = vmatpush2.msra.mxu0 0.0
    %1239 = vmatprep.subr.mxu0 0.0
    %1240 = vmatpush2.msra.mxu0 0.0
    %1241 = vmatprep.subr.mxu0 0.0
    %1242 = vmatpush2.msra.mxu0 0.0
    %1243 = vmatprep.subr.mxu0 0.0
    %1244 = vmatpush2.msra.mxu0 0.0
    %1245 = vmatprep.subr.mxu0 0.0
    %1246 = vmatpush2.msra.mxu0 0.0
    %1247 = vmatprep.subr.mxu0 0.0
    %1248 = vmatpush2.msra.mxu0 0.0
    %1249 = vmatprep.subr.mxu0 0.0
    %1250 = vmatpush2.msra.mxu0 0.0
    %1251 = vmatprep.subr.mxu0 0.0
    %1252 = vmatpush2.msra.mxu0 0.0
    %1253 = vmatprep.subr.mxu0 0.0
    %1254 = vmatpush2.msra.mxu0 0.0
    %1255 = vmatprep.subr.mxu0 0.0
    %1256 = vmatpush2.msra.mxu0 0.0
    %1257 = vmatprep.subr.mxu0 0.0
    %1258 = vmatpush2.msra.mxu0 0.0
    %1259 = vmatprep.mubr.f32.mxu0 0.0
    %1260 = vmatmul.mubr.f32.gmra.mxu0 %v1122
    %v1261 = vpop.f32.mrf.mxu0
    %v1262 = vadd.f32 %v1112, %v1261
    %v1263 = vpop.f32.mrf.mxu0
    %v1264 = vadd.f32 %v1116, %v1263
    %1265 = vdwg.mxu0
    %v1266 = vmax.f32 %v1191, 0.0
    %v1267 = vmax.f32 %v1193, 0.0
    %v1268 = vmax.f32 %v1262, 0.0
    %v1269 = vmax.f32 %v1264, 0.0
    %v1270 = vld [vmem:[%s16] sm:$0xff]
    %v1271 = vld [vmem:[%s16 + $0x8] sm:$0xff]
    %v1272 = vld [vmem:[%s16 + $0x10] sm:$0xff]
    %v1273 = vld [vmem:[%s16 + $0x18] sm:$0xff]
    %v1274 = vld [vmem:[%s16 + $0x20] sm:$0xff]
    %v1275 = vld [vmem:[%s16 + $0x28] sm:$0xff]
    %v1276 = vld [vmem:[%s16 + $0x30] sm:$0xff]
    %v1277 = vld [vmem:[%s16 + $0x38] sm:$0xff]
    %v1278 = vld [vmem:[%s16 + $0x40] sm:$0xff]
    %v1279 = vld [vmem:[%s16 + $0x48] sm:$0xff]
    %v1280 = vld [vmem:[%s16 + $0x50] sm:$0xff]
    %v1281 = vld [vmem:[%s16 + $0x58] sm:$0xff]
    %v1282 = vld [vmem:[%s16 + $0x60] sm:$0xff]
    %v1283 = vld [vmem:[%s16 + $0x68] sm:$0xff]
    %v1284 = vld [vmem:[%s16 + $0x70] sm:$0xff]
    %v1285 = vld [vmem:[%s16 + $0x78] sm:$0xff]
    %v1286 = vld [vmem:[%s16 + $0x80] sm:$0xff]
    %v1287 = vld [vmem:[%s16 + $0x88] sm:$0xff]
    %v1288 = vld [vmem:[%s16 + $0x90] sm:$0xff]
    %v1289 = vld [vmem:[%s16 + $0x98] sm:$0xff]
    %v1290 = vld [vmem:[%s16 + $0xa0] sm:$0xff]
    %v1291 = vld [vmem:[%s16 + $0xa8] sm:$0xff]
    %v1292 = vld [vmem:[%s16 + $0xb0] sm:$0xff]
    %v1293 = vld [vmem:[%s16 + $0xb8] sm:$0xff]
    %v1294 = vld [vmem:[%s16 + $0xc0] sm:$0xff]
    %v1295 = vld [vmem:[%s16 + $0xc8] sm:$0xff]
    %v1296 = vld [vmem:[%s16 + $0xd0] sm:$0xff]
    %v1297 = vld [vmem:[%s16 + $0xd8] sm:$0xff]
    %v1298 = vld [vmem:[%s16 + $0xe0] sm:$0xff]
    %v1299 = vld [vmem:[%s16 + $0xe8] sm:$0xff]
    %v1300 = vld [vmem:[%s16 + $0xf0] sm:$0xff]
    %v1301 = vld [vmem:[%s16 + $0xf8] sm:$0xff]
    %v1302 = vld [vmem:[%s16 + $0x100] sm:$0xff]
    %v1303 = vld [vmem:[%s16 + $0x108] sm:$0xff]
    %v1304 = vld [vmem:[%s16 + $0x110] sm:$0xff]
    %v1305 = vld [vmem:[%s16 + $0x118] sm:$0xff]
    %v1306 = vld [vmem:[%s16 + $0x120] sm:$0xff]
    %v1307 = vld [vmem:[%s16 + $0x128] sm:$0xff]
    %v1308 = vld [vmem:[%s16 + $0x130] sm:$0xff]
    %v1309 = vld [vmem:[%s16 + $0x138] sm:$0xff]
    %v1310 = vld [vmem:[%s16 + $0x140] sm:$0xff]
    %v1311 = vld [vmem:[%s16 + $0x148] sm:$0xff]
    %v1312 = vld [vmem:[%s16 + $0x150] sm:$0xff]
    %v1313 = vld [vmem:[%s16 + $0x158] sm:$0xff]
    %v1314 = vld [vmem:[%s16 + $0x160] sm:$0xff]
    %v1315 = vld [vmem:[%s16 + $0x168] sm:$0xff]
    %v1316 = vld [vmem:[%s16 + $0x170] sm:$0xff]
    %v1317 = vld [vmem:[%s16 + $0x178] sm:$0xff]
    %v1318 = vld [vmem:[%s16 + $0x180] sm:$0xff]
    %v1319 = vld [vmem:[%s16 + $0x188] sm:$0xff]
    %v1320 = vld [vmem:[%s16 + $0x190] sm:$0xff]
    %v1321 = vld [vmem:[%s16 + $0x198] sm:$0xff]
    %v1322 = vld [vmem:[%s16 + $0x1a0] sm:$0xff]
    %v1323 = vld [vmem:[%s16 + $0x1a8] sm:$0xff]
    %v1324 = vld [vmem:[%s16 + $0x1b0] sm:$0xff]
    %v1325 = vld [vmem:[%s16 + $0x1b8] sm:$0xff]
    %v1326 = vld [vmem:[%s16 + $0x1c0] sm:$0xff]
    %v1327 = vld [vmem:[%s16 + $0x1c8] sm:$0xff]
    %v1328 = vld [vmem:[%s16 + $0x1d0] sm:$0xff]
    %v1329 = vld [vmem:[%s16 + $0x1d8] sm:$0xff]
    %v1330 = vld [vmem:[%s16 + $0x1e0] sm:$0xff]
    %v1331 = vld [vmem:[%s16 + $0x1e8] sm:$0xff]
    %v1332 = vld [vmem:[%s16 + $0x1f0] sm:$0xff]
    %v1333 = vld [vmem:[%s16 + $0x1f8] sm:$0xff]
    %v1334 = vld [vmem:[#allocation18] sm:$0x1]
    %v1336 = vlaneseq
    %v1337 = vshrl.u32 %v1336, 7
    %v1338 = vsub.s32 0, %v1337
    %v1339 = vrot.slane %v1334, %v1338
    %1341 = vmatprep.subr.mxu0 0.0
    %1342 = vmatpush1.msra.mxu0 %v1285
    %1343 = vmatprep.subr.mxu0 0.0
    %1344 = vmatpush1.msra.mxu0 %v1284
    %1345 = vmatprep.subr.mxu0 0.0
    %1346 = vmatpush1.msra.mxu0 %v1283
    %1347 = vmatprep.subr.mxu0 0.0
    %1348 = vmatpush1.msra.mxu0 %v1282
    %1349 = vmatprep.subr.mxu0 0.0
    %1350 = vmatpush1.msra.mxu0 %v1281
    %1351 = vmatprep.subr.mxu0 0.0
    %1352 = vmatpush1.msra.mxu0 %v1280
    %1353 = vmatprep.subr.mxu0 0.0
    %1354 = vmatpush1.msra.mxu0 %v1279
    %1355 = vmatprep.subr.mxu0 0.0
    %1356 = vmatpush1.msra.mxu0 %v1278
    %1357 = vmatprep.subr.mxu0 0.0
    %1358 = vmatpush1.msra.mxu0 %v1277
    %1359 = vmatprep.subr.mxu0 0.0
    %1360 = vmatpush1.msra.mxu0 %v1276
    %1361 = vmatprep.subr.mxu0 0.0
    %1362 = vmatpush1.msra.mxu0 %v1275
    %1363 = vmatprep.subr.mxu0 0.0
    %1364 = vmatpush1.msra.mxu0 %v1274
    %1365 = vmatprep.subr.mxu0 0.0
    %1366 = vmatpush1.msra.mxu0 %v1273
    %1367 = vmatprep.subr.mxu0 0.0
    %1368 = vmatpush1.msra.mxu0 %v1272
    %1369 = vmatprep.subr.mxu0 0.0
    %1370 = vmatpush1.msra.mxu0 %v1271
    %1371 = vmatprep.subr.mxu0 0.0
    %1372 = vmatpush1.msra.mxu0 %v1270
    %1373 = vmatprep.subr.mxu0 0.0
    %1374 = vmatpush2.msra.mxu0 %v1301
    %1375 = vmatprep.subr.mxu0 0.0
    %1376 = vmatpush2.msra.mxu0 %v1300
    %1377 = vmatprep.subr.mxu0 0.0
    %1378 = vmatpush2.msra.mxu0 %v1299
    %1379 = vmatprep.subr.mxu0 0.0
    %1380 = vmatpush2.msra.mxu0 %v1298
    %1381 = vmatprep.subr.mxu0 0.0
    %1382 = vmatpush2.msra.mxu0 %v1297
    %1383 = vmatprep.subr.mxu0 0.0
    %1384 = vmatpush2.msra.mxu0 %v1296
    %1385 = vmatprep.subr.mxu0 0.0
    %1386 = vmatpush2.msra.mxu0 %v1295
    %1387 = vmatprep.subr.mxu0 0.0
    %1388 = vmatpush2.msra.mxu0 %v1294
    %1389 = vmatprep.subr.mxu0 0.0
    %1390 = vmatpush2.msra.mxu0 %v1293
    %1391 = vmatprep.subr.mxu0 0.0
    %1392 = vmatpush2.msra.mxu0 %v1292
    %1393 = vmatprep.subr.mxu0 0.0
    %1394 = vmatpush2.msra.mxu0 %v1291
    %1395 = vmatprep.subr.mxu0 0.0
    %1396 = vmatpush2.msra.mxu0 %v1290
    %1397 = vmatprep.subr.mxu0 0.0
    %1398 = vmatpush2.msra.mxu0 %v1289
    %1399 = vmatprep.subr.mxu0 0.0
    %1400 = vmatpush2.msra.mxu0 %v1288
    %1401 = vmatprep.subr.mxu0 0.0
    %1402 = vmatpush2.msra.mxu0 %v1287
    %1403 = vmatprep.subr.mxu0 0.0
    %1404 = vmatpush2.msra.mxu0 %v1286
    %1405 = vmatprep.mubr.f32.mxu0 %v1267
    %1406 = vmatmul.mubr.f32.gmra.mxu0 %v1266
    %v1407 = vpop.f32.mrf.mxu0
    %v1408 = vadd.f32 %v1339, %v1407
    %v1409 = vpop.f32.mrf.mxu0
    %1410 = vdwg.mxu0
    %1411 = vmatprep.subr.mxu0 0.0
    %1412 = vmatpush1.msra.mxu0 %v1317
    %1413 = vmatprep.subr.mxu0 0.0
    %1414 = vmatpush1.msra.mxu0 %v1316
    %1415 = vmatprep.subr.mxu0 0.0
    %1416 = vmatpush1.msra.mxu0 %v1315
    %1417 = vmatprep.subr.mxu0 0.0
    %1418 = vmatpush1.msra.mxu0 %v1314
    %1419 = vmatprep.subr.mxu0 0.0
    %1420 = vmatpush1.msra.mxu0 %v1313
    %1421 = vmatprep.subr.mxu0 0.0
    %1422 = vmatpush1.msra.mxu0 %v1312
    %1423 = vmatprep.subr.mxu0 0.0
    %1424 = vmatpush1.msra.mxu0 %v1311
    %1425 = vmatprep.subr.mxu0 0.0
    %1426 = vmatpush1.msra.mxu0 %v1310
    %1427 = vmatprep.subr.mxu0 0.0
    %1428 = vmatpush1.msra.mxu0 %v1309
    %1429 = vmatprep.subr.mxu0 0.0
    %1430 = vmatpush1.msra.mxu0 %v1308
    %1431 = vmatprep.subr.mxu0 0.0
    %1432 = vmatpush1.msra.mxu0 %v1307
    %1433 = vmatprep.subr.mxu0 0.0
    %1434 = vmatpush1.msra.mxu0 %v1306
    %1435 = vmatprep.subr.mxu0 0.0
    %1436 = vmatpush1.msra.mxu0 %v1305
    %1437 = vmatprep.subr.mxu0 0.0
    %1438 = vmatpush1.msra.mxu0 %v1304
    %1439 = vmatprep.subr.mxu0 0.0
    %1440 = vmatpush1.msra.mxu0 %v1303
    %1441 = vmatprep.subr.mxu0 0.0
    %1442 = vmatpush1.msra.mxu0 %v1302
    %1443 = vmatprep.subr.mxu0 0.0
    %1444 = vmatpush2.msra.mxu0 %v1333
    %1445 = vmatprep.subr.mxu0 0.0
    %1446 = vmatpush2.msra.mxu0 %v1332
    %1447 = vmatprep.subr.mxu0 0.0
    %1448 = vmatpush2.msra.mxu0 %v1331
    %1449 = vmatprep.subr.mxu0 0.0
    %1450 = vmatpush2.msra.mxu0 %v1330
    %1451 = vmatprep.subr.mxu0 0.0
    %1452 = vmatpush2.msra.mxu0 %v1329
    %1453 = vmatprep.subr.mxu0 0.0
    %1454 = vmatpush2.msra.mxu0 %v1328
    %1455 = vmatprep.subr.mxu0 0.0
    %1456 = vmatpush2.msra.mxu0 %v1327
    %1457 = vmatprep.subr.mxu0 0.0
    %1458 = vmatpush2.msra.mxu0 %v1326
    %1459 = vmatprep.subr.mxu0 0.0
    %1460 = vmatpush2.msra.mxu0 %v1325
    %1461 = vmatprep.subr.mxu0 0.0
    %1462 = vmatpush2.msra.mxu0 %v1324
    %1463 = vmatprep.subr.mxu0 0.0
    %1464 = vmatpush2.msra.mxu0 %v1323
    %1465 = vmatprep.subr.mxu0 0.0
    %1466 = vmatpush2.msra.mxu0 %v1322
    %1467 = vmatprep.subr.mxu0 0.0
    %1468 = vmatpush2.msra.mxu0 %v1321
    %1469 = vmatprep.subr.mxu0 0.0
    %1470 = vmatpush2.msra.mxu0 %v1320
    %1471 = vmatprep.subr.mxu0 0.0
    %1472 = vmatpush2.msra.mxu0 %v1319
    %1473 = vmatprep.subr.mxu0 0.0
    %1474 = vmatpush2.msra.mxu0 %v1318
    %1475 = vmatprep.mubr.f32.mxu0 %v1269
    %1476 = vmatmul.mubr.f32.gmra.mxu0 %v1268
    %v1477 = vpop.f32.mrf.mxu0
    %v1478 = vadd.f32 %v1408, %v1477
    %v1479 = vpop.f32.mrf.mxu0
    %1480 = vdwg.mxu0
    %v1482 = vrot.slane %v1478, 1
    %1483 = vrot.lane.b32.xlu0 %v1482, 64
    %v1484 = vpop.permute.xlu0 %1483
    %v1486 = vsel %vm299, %v1478, %v1484
    %1487 = vst [vmem:[%s18] sm:$0x1] %v1486
    // Predicated region
    $region106: #{protocom_forward.1} parent=1 // pred_check
      _
    $region107: #{protocom_forward.1} parent=1 // pred_check_branch
      %1489 = sbr.rel (0) target = $region109
    $region108: #{protocom_forward.1} parent=1 // pred_region
      _
    $region109: #{protocom_forward.1} parent=1 // pred_fallthru
      _
    // Predicated region
    $region110: #{protocom_forward.1} parent=1 // pred_check
      _
    $region111: #{protocom_forward.1} parent=1 // pred_check_branch
      %1491 = sbr.rel (0) target = $region113
    $region112: #{protocom_forward.1} parent=1 // pred_region
      _
    $region113: #{protocom_forward.1} parent=1 // pred_fallthru
      _
    %1492 = vsyncpa [#allocation6], 1
    %1493 = vsyncpa [#allocation8], 1
    %1494 = vsyncpa [#allocation11], 1
    %1495 = vsyncpa [#allocation14], 1
    %1496 = vsyncpa [#allocation17], 1

</llo_original>
